<compile_context>
chip_gen: v6e
topology: v6e:2x2x1
jax: 0.10.0
libtpu: 0.0.40
codegen_flags: <defaults>
</compile_context>

<pallas_src>
import jax
import jax.numpy as jnp
from jax.experimental import pallas as pl
from jax.experimental.pallas import tpu as pltpu

HIDDEN = 20      # hidden_dim_1 (= AttentionConv out_channels)
POOL = 4         # _pool_value
KSIZE = 3        # attention kernel_size
PAD = 1          # attention padding
OUT_DIM = 80     # dense out_dim
LANE = 128       # TPU lane width (dense output padded to this inside the kernel)

_VMEM = pl.BlockSpec(memory_space=pltpu.MemorySpace.VMEM)


def _fused_kernel(x_ref, wq_ref, wk_ref, wv_ref, rel_ref, mask_ref,
                  wd_ref, b_ref, o_ref, cflat_ref):
    # x_ref    : (POOL, N)   deinterleaved feature, N = T*W, x[p, t*W+w] = feat[t, w*POOL+p]
    # wq/wk/wv : (C, N)      1x1 conv weights pre-splat across the lane axis
    # rel_ref  : (9, C, N)   rel_h/rel_w positional table pre-splat across lanes
    # mask_ref : (9, N)      1.0 where the neighbour tap is in-bounds, else 0.0
    # wd_ref   : (L, LANE)   dense weight (transposed), out_dim padded 80 -> 128
    # b_ref    : (1, LANE)   dense bias, padded
    # o_ref    : (T, LANE)   lane-dense output rows
    # cflat_ref: (1, C*N)    channel-major flattened activations (lane-flat scratch)
    _, N = x_ref.shape
    C = wq_ref.shape[0]
    T = o_ref.shape[0]
    W = N // T
    L = C * W
    NTAP = KSIZE * KSIZE

    # ---- 1) MaxPool2d((1, POOL)): sublane max over the deinterleaved rows ------
    xf = jnp.max(x_ref[...], axis=0, keepdims=True)                    # (1, N)

    # ---- 2) the 9 zero-padded neighbour maps (XLU rolls + precomputed masks) ---
    # nb[idx][n] == pooled value at (t+kh-1, w+kw-1) with zero padding, n = t*W+w.
    nbs = []
    for kh in range(KSIZE):
        for kw in range(KSIZE):
            idx = kh * KSIZE + kw
            delta = (kh - PAD) * W + (kw - PAD)
            rolled = xf if delta == 0 else pltpu.roll(
                xf, shift=(N - delta) % N, axis=1)
            nbs.append(rolled * mask_ref[idx:idx + 1, :])              # (1, N)

    q = wq_ref[...] * jnp.broadcast_to(xf, (C, N))                     # query_conv(x)
    wk_b = wk_ref[...]

    # ---- 3) AttentionConv softmax over the 9 taps: two-pass (9 exps total) -----
    # pass 1: running max of the logits (no transcendentals)
    m = None
    for idx in range(NTAP):
        nb_b = jnp.broadcast_to(nbs[idx], (C, N))
        logit = q * (wk_b * nb_b + rel_ref[idx])                       # q*(key+rel)
        m = logit if m is None else jnp.maximum(m, logit)

    # pass 2: exp / sum / value accumulation; value_conv weight factored out.
    s = jnp.zeros((C, N), jnp.float32)
    acc = jnp.zeros((C, N), jnp.float32)
    for idx in range(NTAP):
        nb_b = jnp.broadcast_to(nbs[idx], (C, N))
        logit = q * (wk_b * nb_b + rel_ref[idx])
        p = jnp.exp(logit - m)
        s = s + p
        acc = acc + p * nb_b

    # softmax normalisation, value_conv weight, fused F.relu
    attn = jnp.maximum(
        wv_ref[...] * acc * pl.reciprocal(s, approx=False), 0.0)       # (C, N)

    # ---- 4) torch transpose(0,1).view(-1, L): channel-major flatten ------------
    # Channel c occupies flat positions [c*N, (c+1)*N): full-width, 128-aligned
    # stores into the lane-flat scratch (no partial/masked stores, no rotations).
    for c in range(C):
        cflat_ref[0:1, c * N:(c + 1) * N] = attn[c:c + 1, :]

    # ---- 5) Linear(L, 80): torch's per-row dense loop == T small MXU matmuls ---
    wd = wd_ref[...]                                                   # hoisted load
    b = b_ref[...]
    for t in range(T):
        rrow = cflat_ref[0:1, t * L:(t + 1) * L]                       # (1, L)
        o_ref[t:t + 1, :] = jnp.dot(rrow, wd,
                                    preferred_element_type=jnp.float32) + b


def ann_classifier_forward(feature, params):
    """feature: (T, D) float32 -> (1, T, OUT_DIM), matching ANNClassifier.forward."""
    T, D = feature.shape
    assert D % POOL == 0, "input_dim must be divisible by the pool width"
    W = D // POOL
    N = T * W
    L = HIDDEN * W
    NTAP = KSIZE * KSIZE

    # Deinterleave so the max-pool becomes a sublane reduction in-kernel:
    # x_pool[p, t*W + w] = feature[t, w*POOL + p]
    x_pool = jnp.transpose(feature.reshape(N, POOL))                   # (POOL, N)

    # Pre-splat the tiny 1x1-conv weights and the rel table across the lane axis
    # (removes per-tap broadcast_in_dim from the unrolled kernel loops).
    wq_b = jnp.broadcast_to(params["wq"], (HIDDEN, N))
    wk_b = jnp.broadcast_to(params["wk"], (HIDDEN, N))
    wv_b = jnp.broadcast_to(params["wv"], (HIDDEN, N))
    rel_b = jnp.broadcast_to(params["rel"].T[:, :, None], (NTAP, HIDDEN, N))

    # Zero-padding validity mask per tap (shape-only, data independent).
    lane = jnp.arange(N)
    trow = lane // W
    tcol = lane % W
    masks = []
    for kh in range(KSIZE):
        for kw in range(KSIZE):
            dh, dw = kh - PAD, kw - PAD
            masks.append((trow + dh >= 0) & (trow + dh < T)
                         & (tcol + dw >= 0) & (tcol + dw < W))
    mask = jnp.stack(masks).astype(jnp.float32)                        # (NTAP, N)

    # Lane-dense dense layer: pad out_dim 80 -> 128; sliced back after the call.
    wd_pad = jnp.zeros((L, LANE), jnp.float32).at[:, :OUT_DIM].set(params["w_dense_t"])
    b_pad = jnp.zeros((1, LANE), jnp.float32).at[:, :OUT_DIM].set(params["b_dense"])

    # TODO(synk): for production sizes (large T / batches), add a grid over T
    # ("parallel" for v7x megacore) and bound the (1, HIDDEN*N) scratch via
    # vmem_limit_bytes; at these demo sizes everything fits in one block.
    out = pl.pallas_call(
        _fused_kernel,
        out_shape=jax.ShapeDtypeStruct((T, LANE), jnp.float32),
        in_specs=[_VMEM] * 8,
        out_specs=_VMEM,
        scratch_shapes=[pltpu.VMEM((1, HIDDEN * N), jnp.float32)],
    )(x_pool, wq_b, wk_b, wv_b, rel_b, mask, wd_pad, b_pad)

    # torch: stack per-row dense outputs -> (T, 1, 80) -> transpose(0, 1) -> (1, T, 80)
    return out[:, :OUT_DIM][None, :, :]


def init_params(key, input_dim):
    W = input_dim // POOL
    L = HIDDEN * W
    k1, k2, k3, k4, k5, k6, k7 = jax.random.split(key, 7)
    # kaiming_normal_(fan_out, relu) for the three 1x1 convs: std = sqrt(2 / out_channels)
    std = (2.0 / HIDDEN) ** 0.5
    wq = jax.random.normal(k1, (HIDDEN, 1), jnp.float32) * std
    wk = jax.random.normal(k2, (HIDDEN, 1), jnp.float32) * std
    wv = jax.random.normal(k3, (HIDDEN, 1), jnp.float32) * std
    # rel_h / rel_w ~ N(0, 1), shapes [10, 3]; fold once into rel[C, 9]:
    # rel[c, kh*3+kw] = rel_h[c, kh] (c < 10)  |  rel_w[c-10, kw] (c >= 10)
    rel_h = jax.random.normal(k4, (HIDDEN // 2, KSIZE), jnp.float32)
    rel_w = jax.random.normal(k5, (HIDDEN // 2, KSIZE), jnp.float32)
    rel = jnp.concatenate([jnp.repeat(rel_h, KSIZE, axis=1),
                           jnp.tile(rel_w, (1, KSIZE))], axis=0)
    # nn.Linear default init: U(-1/sqrt(L), 1/sqrt(L)); weight stored transposed [L, 80]
    bound = 1.0 / (L ** 0.5)
    w_dense_t = jax.random.uniform(k6, (L, OUT_DIM), jnp.float32, -bound, bound)
    b_dense = jax.random.uniform(k7, (1, OUT_DIM), jnp.float32, -bound, bound)
    return dict(wq=wq, wk=wk, wv=wv, rel=rel,
                w_dense_t=w_dense_t, b_dense=b_dense)


if __name__ == "__main__":
    T, D = 8, 64                                    # seq=8, input_dim=64 (T*W = 128 lanes)
    key = jax.random.PRNGKey(0)
    kx, kp = jax.random.split(key)
    feature = jax.random.normal(kx, (T, D), jnp.float32)
    params = init_params(kp, D)

    out = jax.jit(ann_classifier_forward)(feature, params)
    out = jax.block_until_ready(out)
    assert out.shape == (1, T, OUT_DIM), out.shape
    assert jnp.isfinite(out).all()
    print("KERNEL_OK")
</pallas_src>

<mosaic_0001>
module attributes {stable_mosaic.version = 11 : i64} {
  func.func @_fused_kernel(%arg0: memref<4x128xf32, #tpu.memory_space<vmem>>, %arg1: memref<20x128xf32, #tpu.memory_space<vmem>>, %arg2: memref<20x128xf32, #tpu.memory_space<vmem>>, %arg3: memref<20x128xf32, #tpu.memory_space<vmem>>, %arg4: memref<9x20x128xf32, #tpu.memory_space<vmem>>, %arg5: memref<9x128xf32, #tpu.memory_space<vmem>>, %arg6: memref<320x128xf32, #tpu.memory_space<vmem>>, %arg7: memref<1x128xf32, #tpu.memory_space<vmem>>, %arg8: memref<8x128xf32, #tpu.memory_space<vmem>>, %arg9: memref<1x2560xf32, #tpu.memory_space<vmem>>) attributes {dimension_semantics = [], scalar_prefetch = 0 : i64, scratch_operands = 1 : i64, tpu.core_type = #tpu.core_type<tc>} {
    %c0 = arith.constant 0 : index
    %c0_0 = arith.constant 0 : index
    %0 = vector.load %arg0[%c0, %c0_0] : memref<4x128xf32, #tpu.memory_space<vmem>>, vector<4x128xf32>
    %cst = arith.constant dense<0xFF800000> : vector<128xf32>
    %1 = vector.multi_reduction <maximumf>, %0, %cst [0] : vector<4x128xf32> to vector<128xf32>
    %2 = vector.shape_cast %1 : vector<128xf32> to vector<1x128xf32>
    %c17_i32 = arith.constant 17 : i32
    %3 = tpu.dynamic_rotate %2 by %c17_i32 dim 1 : vector<1x128xf32>, i32 -> vector<1x128xf32>
    %c0_1 = arith.constant 0 : index
    %c0_2 = arith.constant 0 : index
    %4 = vector.load %arg5[%c0_1, %c0_2] : memref<9x128xf32, #tpu.memory_space<vmem>>, vector<1x128xf32>
    %5 = arith.mulf %3, %4 : vector<1x128xf32>
    %c16_i32 = arith.constant 16 : i32
    %6 = tpu.dynamic_rotate %2 by %c16_i32 dim 1 : vector<1x128xf32>, i32 -> vector<1x128xf32>
    %c1 = arith.constant 1 : index
    %c0_3 = arith.constant 0 : index
    %7 = vector.load %arg5[%c1, %c0_3] : memref<9x128xf32, #tpu.memory_space<vmem>>, vector<1x128xf32>
    %8 = arith.mulf %6, %7 : vector<1x128xf32>
    %c15_i32 = arith.constant 15 : i32
    %9 = tpu.dynamic_rotate %2 by %c15_i32 dim 1 : vector<1x128xf32>, i32 -> vector<1x128xf32>
    %c2 = arith.constant 2 : index
    %c0_4 = arith.constant 0 : index
    %10 = vector.load %arg5[%c2, %c0_4] : memref<9x128xf32, #tpu.memory_space<vmem>>, vector<1x128xf32>
    %11 = arith.mulf %9, %10 : vector<1x128xf32>
    %c1_i32 = arith.constant 1 : i32
    %12 = tpu.dynamic_rotate %2 by %c1_i32 dim 1 : vector<1x128xf32>, i32 -> vector<1x128xf32>
    %c3 = arith.constant 3 : index
    %c0_5 = arith.constant 0 : index
    %13 = vector.load %arg5[%c3, %c0_5] : memref<9x128xf32, #tpu.memory_space<vmem>>, vector<1x128xf32>
    %14 = arith.mulf %12, %13 : vector<1x128xf32>
    %c4 = arith.constant 4 : index
    %c0_6 = arith.constant 0 : index
    %15 = vector.load %arg5[%c4, %c0_6] : memref<9x128xf32, #tpu.memory_space<vmem>>, vector<1x128xf32>
    %16 = arith.mulf %2, %15 : vector<1x128xf32>
    %c127_i32 = arith.constant 127 : i32
    %17 = tpu.dynamic_rotate %2 by %c127_i32 dim 1 : vector<1x128xf32>, i32 -> vector<1x128xf32>
    %c5 = arith.constant 5 : index
    %c0_7 = arith.constant 0 : index
    %18 = vector.load %arg5[%c5, %c0_7] : memref<9x128xf32, #tpu.memory_space<vmem>>, vector<1x128xf32>
    %19 = arith.mulf %17, %18 : vector<1x128xf32>
    %c113_i32 = arith.constant 113 : i32
    %20 = tpu.dynamic_rotate %2 by %c113_i32 dim 1 : vector<1x128xf32>, i32 -> vector<1x128xf32>
    %c6 = arith.constant 6 : index
    %c0_8 = arith.constant 0 : index
    %21 = vector.load %arg5[%c6, %c0_8] : memref<9x128xf32, #tpu.memory_space<vmem>>, vector<1x128xf32>
    %22 = arith.mulf %20, %21 : vector<1x128xf32>
    %c112_i32 = arith.constant 112 : i32
    %23 = tpu.dynamic_rotate %2 by %c112_i32 dim 1 : vector<1x128xf32>, i32 -> vector<1x128xf32>
    %c7 = arith.constant 7 : index
    %c0_9 = arith.constant 0 : index
    %24 = vector.load %arg5[%c7, %c0_9] : memref<9x128xf32, #tpu.memory_space<vmem>>, vector<1x128xf32>
    %25 = arith.mulf %23, %24 : vector<1x128xf32>
    %c111_i32 = arith.constant 111 : i32
    %26 = tpu.dynamic_rotate %2 by %c111_i32 dim 1 : vector<1x128xf32>, i32 -> vector<1x128xf32>
    %c8 = arith.constant 8 : index
    %c0_10 = arith.constant 0 : index
    %27 = vector.load %arg5[%c8, %c0_10] : memref<9x128xf32, #tpu.memory_space<vmem>>, vector<1x128xf32>
    %28 = arith.mulf %26, %27 : vector<1x128xf32>
    %c0_11 = arith.constant 0 : index
    %c0_12 = arith.constant 0 : index
    %29 = vector.load %arg1[%c0_11, %c0_12] : memref<20x128xf32, #tpu.memory_space<vmem>>, vector<20x128xf32>
    %30 = vector.shape_cast %2 : vector<1x128xf32> to vector<1x128xf32>
    %31 = vector.broadcast %30 : vector<1x128xf32> to vector<20x128xf32>
    %32 = arith.mulf %29, %31 : vector<20x128xf32>
    %c0_13 = arith.constant 0 : index
    %c0_14 = arith.constant 0 : index
    %33 = vector.load %arg2[%c0_13, %c0_14] : memref<20x128xf32, #tpu.memory_space<vmem>>, vector<20x128xf32>
    %34 = vector.shape_cast %5 : vector<1x128xf32> to vector<1x128xf32>
    %35 = vector.broadcast %34 : vector<1x128xf32> to vector<20x128xf32>
    %36 = arith.mulf %33, %35 : vector<20x128xf32>
    %c0_15 = arith.constant 0 : index
    %c0_16 = arith.constant 0 : index
    %c0_17 = arith.constant 0 : index
    %37 = vector.load %arg4[%c0_15, %c0_16, %c0_17] : memref<9x20x128xf32, #tpu.memory_space<vmem>>, vector<1x20x128xf32>
    %38 = vector.shape_cast %37 : vector<1x20x128xf32> to vector<20x128xf32>
    %39 = arith.addf %36, %38 : vector<20x128xf32>
    %40 = arith.mulf %32, %39 : vector<20x128xf32>
    %41 = vector.shape_cast %8 : vector<1x128xf32> to vector<1x128xf32>
    %42 = vector.broadcast %41 : vector<1x128xf32> to vector<20x128xf32>
    %43 = arith.mulf %33, %42 : vector<20x128xf32>
    %c1_18 = arith.constant 1 : index
    %c0_19 = arith.constant 0 : index
    %c0_20 = arith.constant 0 : index
    %44 = vector.load %arg4[%c1_18, %c0_19, %c0_20] : memref<9x20x128xf32, #tpu.memory_space<vmem>>, vector<1x20x128xf32>
    %45 = vector.shape_cast %44 : vector<1x20x128xf32> to vector<20x128xf32>
    %46 = arith.addf %43, %45 : vector<20x128xf32>
    %47 = arith.mulf %32, %46 : vector<20x128xf32>
    %48 = arith.maximumf %40, %47 : vector<20x128xf32>
    %49 = vector.shape_cast %11 : vector<1x128xf32> to vector<1x128xf32>
    %50 = vector.broadcast %49 : vector<1x128xf32> to vector<20x128xf32>
    %51 = arith.mulf %33, %50 : vector<20x128xf32>
    %c2_21 = arith.constant 2 : index
    %c0_22 = arith.constant 0 : index
    %c0_23 = arith.constant 0 : index
    %52 = vector.load %arg4[%c2_21, %c0_22, %c0_23] : memref<9x20x128xf32, #tpu.memory_space<vmem>>, vector<1x20x128xf32>
    %53 = vector.shape_cast %52 : vector<1x20x128xf32> to vector<20x128xf32>
    %54 = arith.addf %51, %53 : vector<20x128xf32>
    %55 = arith.mulf %32, %54 : vector<20x128xf32>
    %56 = arith.maximumf %48, %55 : vector<20x128xf32>
    %57 = vector.shape_cast %14 : vector<1x128xf32> to vector<1x128xf32>
    %58 = vector.broadcast %57 : vector<1x128xf32> to vector<20x128xf32>
    %59 = arith.mulf %33, %58 : vector<20x128xf32>
    %c3_24 = arith.constant 3 : index
    %c0_25 = arith.constant 0 : index
    %c0_26 = arith.constant 0 : index
    %60 = vector.load %arg4[%c3_24, %c0_25, %c0_26] : memref<9x20x128xf32, #tpu.memory_space<vmem>>, vector<1x20x128xf32>
    %61 = vector.shape_cast %60 : vector<1x20x128xf32> to vector<20x128xf32>
    %62 = arith.addf %59, %61 : vector<20x128xf32>
    %63 = arith.mulf %32, %62 : vector<20x128xf32>
    %64 = arith.maximumf %56, %63 : vector<20x128xf32>
    %65 = vector.shape_cast %16 : vector<1x128xf32> to vector<1x128xf32>
    %66 = vector.broadcast %65 : vector<1x128xf32> to vector<20x128xf32>
    %67 = arith.mulf %33, %66 : vector<20x128xf32>
    %c4_27 = arith.constant 4 : index
    %c0_28 = arith.constant 0 : index
    %c0_29 = arith.constant 0 : index
    %68 = vector.load %arg4[%c4_27, %c0_28, %c0_29] : memref<9x20x128xf32, #tpu.memory_space<vmem>>, vector<1x20x128xf32>
    %69 = vector.shape_cast %68 : vector<1x20x128xf32> to vector<20x128xf32>
    %70 = arith.addf %67, %69 : vector<20x128xf32>
    %71 = arith.mulf %32, %70 : vector<20x128xf32>
    %72 = arith.maximumf %64, %71 : vector<20x128xf32>
    %73 = vector.shape_cast %19 : vector<1x128xf32> to vector<1x128xf32>
    %74 = vector.broadcast %73 : vector<1x128xf32> to vector<20x128xf32>
    %75 = arith.mulf %33, %74 : vector<20x128xf32>
    %c5_30 = arith.constant 5 : index
    %c0_31 = arith.constant 0 : index
    %c0_32 = arith.constant 0 : index
    %76 = vector.load %arg4[%c5_30, %c0_31, %c0_32] : memref<9x20x128xf32, #tpu.memory_space<vmem>>, vector<1x20x128xf32>
    %77 = vector.shape_cast %76 : vector<1x20x128xf32> to vector<20x128xf32>
    %78 = arith.addf %75, %77 : vector<20x128xf32>
    %79 = arith.mulf %32, %78 : vector<20x128xf32>
    %80 = arith.maximumf %72, %79 : vector<20x128xf32>
    %81 = vector.shape_cast %22 : vector<1x128xf32> to vector<1x128xf32>
    %82 = vector.broadcast %81 : vector<1x128xf32> to vector<20x128xf32>
    %83 = arith.mulf %33, %82 : vector<20x128xf32>
    %c6_33 = arith.constant 6 : index
    %c0_34 = arith.constant 0 : index
    %c0_35 = arith.constant 0 : index
    %84 = vector.load %arg4[%c6_33, %c0_34, %c0_35] : memref<9x20x128xf32, #tpu.memory_space<vmem>>, vector<1x20x128xf32>
    %85 = vector.shape_cast %84 : vector<1x20x128xf32> to vector<20x128xf32>
    %86 = arith.addf %83, %85 : vector<20x128xf32>
    %87 = arith.mulf %32, %86 : vector<20x128xf32>
    %88 = arith.maximumf %80, %87 : vector<20x128xf32>
    %89 = vector.shape_cast %25 : vector<1x128xf32> to vector<1x128xf32>
    %90 = vector.broadcast %89 : vector<1x128xf32> to vector<20x128xf32>
    %91 = arith.mulf %33, %90 : vector<20x128xf32>
    %c7_36 = arith.constant 7 : index
    %c0_37 = arith.constant 0 : index
    %c0_38 = arith.constant 0 : index
    %92 = vector.load %arg4[%c7_36, %c0_37, %c0_38] : memref<9x20x128xf32, #tpu.memory_space<vmem>>, vector<1x20x128xf32>
    %93 = vector.shape_cast %92 : vector<1x20x128xf32> to vector<20x128xf32>
    %94 = arith.addf %91, %93 : vector<20x128xf32>
    %95 = arith.mulf %32, %94 : vector<20x128xf32>
    %96 = arith.maximumf %88, %95 : vector<20x128xf32>
    %97 = vector.shape_cast %28 : vector<1x128xf32> to vector<1x128xf32>
    %98 = vector.broadcast %97 : vector<1x128xf32> to vector<20x128xf32>
    %99 = arith.mulf %33, %98 : vector<20x128xf32>
    %c8_39 = arith.constant 8 : index
    %c0_40 = arith.constant 0 : index
    %c0_41 = arith.constant 0 : index
    %100 = vector.load %arg4[%c8_39, %c0_40, %c0_41] : memref<9x20x128xf32, #tpu.memory_space<vmem>>, vector<1x20x128xf32>
    %101 = vector.shape_cast %100 : vector<1x20x128xf32> to vector<20x128xf32>
    %102 = arith.addf %99, %101 : vector<20x128xf32>
    %103 = arith.mulf %32, %102 : vector<20x128xf32>
    %104 = arith.maximumf %96, %103 : vector<20x128xf32>
    %cst_42 = arith.constant 0.000000e+00 : f32
    %105 = vector.broadcast %cst_42 : f32 to vector<20x128xf32>
    %cst_43 = arith.constant 0.000000e+00 : f32
    %106 = vector.broadcast %cst_43 : f32 to vector<20x128xf32>
    %107 = vector.shape_cast %5 : vector<1x128xf32> to vector<1x128xf32>
    %108 = vector.broadcast %107 : vector<1x128xf32> to vector<20x128xf32>
    %109 = arith.mulf %33, %108 : vector<20x128xf32>
    %c0_44 = arith.constant 0 : index
    %c0_45 = arith.constant 0 : index
    %c0_46 = arith.constant 0 : index
    %110 = vector.load %arg4[%c0_44, %c0_45, %c0_46] : memref<9x20x128xf32, #tpu.memory_space<vmem>>, vector<1x20x128xf32>
    %111 = vector.shape_cast %110 : vector<1x20x128xf32> to vector<20x128xf32>
    %112 = arith.addf %109, %111 : vector<20x128xf32>
    %113 = arith.mulf %32, %112 : vector<20x128xf32>
    %114 = arith.subf %113, %104 : vector<20x128xf32>
    %115 = math.exp %114 : vector<20x128xf32>
    %116 = arith.addf %105, %115 : vector<20x128xf32>
    %117 = arith.mulf %115, %108 : vector<20x128xf32>
    %118 = arith.addf %106, %117 : vector<20x128xf32>
    %119 = vector.shape_cast %8 : vector<1x128xf32> to vector<1x128xf32>
    %120 = vector.broadcast %119 : vector<1x128xf32> to vector<20x128xf32>
    %121 = arith.mulf %33, %120 : vector<20x128xf32>
    %c1_47 = arith.constant 1 : index
    %c0_48 = arith.constant 0 : index
    %c0_49 = arith.constant 0 : index
    %122 = vector.load %arg4[%c1_47, %c0_48, %c0_49] : memref<9x20x128xf32, #tpu.memory_space<vmem>>, vector<1x20x128xf32>
    %123 = vector.shape_cast %122 : vector<1x20x128xf32> to vector<20x128xf32>
    %124 = arith.addf %121, %123 : vector<20x128xf32>
    %125 = arith.mulf %32, %124 : vector<20x128xf32>
    %126 = arith.subf %125, %104 : vector<20x128xf32>
    %127 = math.exp %126 : vector<20x128xf32>
    %128 = arith.addf %116, %127 : vector<20x128xf32>
    %129 = arith.mulf %127, %120 : vector<20x128xf32>
    %130 = arith.addf %118, %129 : vector<20x128xf32>
    %131 = vector.shape_cast %11 : vector<1x128xf32> to vector<1x128xf32>
    %132 = vector.broadcast %131 : vector<1x128xf32> to vector<20x128xf32>
    %133 = arith.mulf %33, %132 : vector<20x128xf32>
    %c2_50 = arith.constant 2 : index
    %c0_51 = arith.constant 0 : index
    %c0_52 = arith.constant 0 : index
    %134 = vector.load %arg4[%c2_50, %c0_51, %c0_52] : memref<9x20x128xf32, #tpu.memory_space<vmem>>, vector<1x20x128xf32>
    %135 = vector.shape_cast %134 : vector<1x20x128xf32> to vector<20x128xf32>
    %136 = arith.addf %133, %135 : vector<20x128xf32>
    %137 = arith.mulf %32, %136 : vector<20x128xf32>
    %138 = arith.subf %137, %104 : vector<20x128xf32>
    %139 = math.exp %138 : vector<20x128xf32>
    %140 = arith.addf %128, %139 : vector<20x128xf32>
    %141 = arith.mulf %139, %132 : vector<20x128xf32>
    %142 = arith.addf %130, %141 : vector<20x128xf32>
    %143 = vector.shape_cast %14 : vector<1x128xf32> to vector<1x128xf32>
    %144 = vector.broadcast %143 : vector<1x128xf32> to vector<20x128xf32>
    %145 = arith.mulf %33, %144 : vector<20x128xf32>
    %c3_53 = arith.constant 3 : index
    %c0_54 = arith.constant 0 : index
    %c0_55 = arith.constant 0 : index
    %146 = vector.load %arg4[%c3_53, %c0_54, %c0_55] : memref<9x20x128xf32, #tpu.memory_space<vmem>>, vector<1x20x128xf32>
    %147 = vector.shape_cast %146 : vector<1x20x128xf32> to vector<20x128xf32>
    %148 = arith.addf %145, %147 : vector<20x128xf32>
    %149 = arith.mulf %32, %148 : vector<20x128xf32>
    %150 = arith.subf %149, %104 : vector<20x128xf32>
    %151 = math.exp %150 : vector<20x128xf32>
    %152 = arith.addf %140, %151 : vector<20x128xf32>
    %153 = arith.mulf %151, %144 : vector<20x128xf32>
    %154 = arith.addf %142, %153 : vector<20x128xf32>
    %155 = vector.shape_cast %16 : vector<1x128xf32> to vector<1x128xf32>
    %156 = vector.broadcast %155 : vector<1x128xf32> to vector<20x128xf32>
    %157 = arith.mulf %33, %156 : vector<20x128xf32>
    %c4_56 = arith.constant 4 : index
    %c0_57 = arith.constant 0 : index
    %c0_58 = arith.constant 0 : index
    %158 = vector.load %arg4[%c4_56, %c0_57, %c0_58] : memref<9x20x128xf32, #tpu.memory_space<vmem>>, vector<1x20x128xf32>
    %159 = vector.shape_cast %158 : vector<1x20x128xf32> to vector<20x128xf32>
    %160 = arith.addf %157, %159 : vector<20x128xf32>
    %161 = arith.mulf %32, %160 : vector<20x128xf32>
    %162 = arith.subf %161, %104 : vector<20x128xf32>
    %163 = math.exp %162 : vector<20x128xf32>
    %164 = arith.addf %152, %163 : vector<20x128xf32>
    %165 = arith.mulf %163, %156 : vector<20x128xf32>
    %166 = arith.addf %154, %165 : vector<20x128xf32>
    %167 = vector.shape_cast %19 : vector<1x128xf32> to vector<1x128xf32>
    %168 = vector.broadcast %167 : vector<1x128xf32> to vector<20x128xf32>
    %169 = arith.mulf %33, %168 : vector<20x128xf32>
    %c5_59 = arith.constant 5 : index
    %c0_60 = arith.constant 0 : index
    %c0_61 = arith.constant 0 : index
    %170 = vector.load %arg4[%c5_59, %c0_60, %c0_61] : memref<9x20x128xf32, #tpu.memory_space<vmem>>, vector<1x20x128xf32>
    %171 = vector.shape_cast %170 : vector<1x20x128xf32> to vector<20x128xf32>
    %172 = arith.addf %169, %171 : vector<20x128xf32>
    %173 = arith.mulf %32, %172 : vector<20x128xf32>
    %174 = arith.subf %173, %104 : vector<20x128xf32>
    %175 = math.exp %174 : vector<20x128xf32>
    %176 = arith.addf %164, %175 : vector<20x128xf32>
    %177 = arith.mulf %175, %168 : vector<20x128xf32>
    %178 = arith.addf %166, %177 : vector<20x128xf32>
    %179 = vector.shape_cast %22 : vector<1x128xf32> to vector<1x128xf32>
    %180 = vector.broadcast %179 : vector<1x128xf32> to vector<20x128xf32>
    %181 = arith.mulf %33, %180 : vector<20x128xf32>
    %c6_62 = arith.constant 6 : index
    %c0_63 = arith.constant 0 : index
    %c0_64 = arith.constant 0 : index
    %182 = vector.load %arg4[%c6_62, %c0_63, %c0_64] : memref<9x20x128xf32, #tpu.memory_space<vmem>>, vector<1x20x128xf32>
    %183 = vector.shape_cast %182 : vector<1x20x128xf32> to vector<20x128xf32>
    %184 = arith.addf %181, %183 : vector<20x128xf32>
    %185 = arith.mulf %32, %184 : vector<20x128xf32>
    %186 = arith.subf %185, %104 : vector<20x128xf32>
    %187 = math.exp %186 : vector<20x128xf32>
    %188 = arith.addf %176, %187 : vector<20x128xf32>
    %189 = arith.mulf %187, %180 : vector<20x128xf32>
    %190 = arith.addf %178, %189 : vector<20x128xf32>
    %191 = vector.shape_cast %25 : vector<1x128xf32> to vector<1x128xf32>
    %192 = vector.broadcast %191 : vector<1x128xf32> to vector<20x128xf32>
    %193 = arith.mulf %33, %192 : vector<20x128xf32>
    %c7_65 = arith.constant 7 : index
    %c0_66 = arith.constant 0 : index
    %c0_67 = arith.constant 0 : index
    %194 = vector.load %arg4[%c7_65, %c0_66, %c0_67] : memref<9x20x128xf32, #tpu.memory_space<vmem>>, vector<1x20x128xf32>
    %195 = vector.shape_cast %194 : vector<1x20x128xf32> to vector<20x128xf32>
    %196 = arith.addf %193, %195 : vector<20x128xf32>
    %197 = arith.mulf %32, %196 : vector<20x128xf32>
    %198 = arith.subf %197, %104 : vector<20x128xf32>
    %199 = math.exp %198 : vector<20x128xf32>
    %200 = arith.addf %188, %199 : vector<20x128xf32>
    %201 = arith.mulf %199, %192 : vector<20x128xf32>
    %202 = arith.addf %190, %201 : vector<20x128xf32>
    %203 = vector.shape_cast %28 : vector<1x128xf32> to vector<1x128xf32>
    %204 = vector.broadcast %203 : vector<1x128xf32> to vector<20x128xf32>
    %205 = arith.mulf %33, %204 : vector<20x128xf32>
    %c8_68 = arith.constant 8 : index
    %c0_69 = arith.constant 0 : index
    %c0_70 = arith.constant 0 : index
    %206 = vector.load %arg4[%c8_68, %c0_69, %c0_70] : memref<9x20x128xf32, #tpu.memory_space<vmem>>, vector<1x20x128xf32>
    %207 = vector.shape_cast %206 : vector<1x20x128xf32> to vector<20x128xf32>
    %208 = arith.addf %205, %207 : vector<20x128xf32>
    %209 = arith.mulf %32, %208 : vector<20x128xf32>
    %210 = arith.subf %209, %104 : vector<20x128xf32>
    %211 = math.exp %210 : vector<20x128xf32>
    %212 = arith.addf %200, %211 : vector<20x128xf32>
    %213 = arith.mulf %211, %204 : vector<20x128xf32>
    %214 = arith.addf %202, %213 : vector<20x128xf32>
    %c0_71 = arith.constant 0 : index
    %c0_72 = arith.constant 0 : index
    %215 = vector.load %arg3[%c0_71, %c0_72] : memref<20x128xf32, #tpu.memory_space<vmem>>, vector<20x128xf32>
    %216 = arith.mulf %215, %214 : vector<20x128xf32>
    %217 = tpu.reciprocal %212 : vector<20x128xf32> -> vector<20x128xf32>
    %218 = arith.mulf %216, %217 : vector<20x128xf32>
    %cst_73 = arith.constant 0.000000e+00 : f32
    %219 = vector.broadcast %cst_73 : f32 to vector<20x128xf32>
    %220 = arith.maximumf %218, %219 : vector<20x128xf32>
    %221 = vector.extract_strided_slice %220 {offsets = [0, 0], sizes = [1, 128], strides = [1, 1]} : vector<20x128xf32> to vector<1x128xf32>
    %c0_74 = arith.constant 0 : index
    %c0_75 = arith.constant 0 : index
    %222 = vector.load %arg9[%c0_74, %c0_75] : memref<1x2560xf32, #tpu.memory_space<vmem>>, vector<1x128xf32>
    tpu.vector_store %arg9[%c0_74, %c0_75], %221 {strides = array<i32>} : memref<1x2560xf32, #tpu.memory_space<vmem>>, vector<1x128xf32>,
    %223 = vector.extract_strided_slice %220 {offsets = [1, 0], sizes = [1, 128], strides = [1, 1]} : vector<20x128xf32> to vector<1x128xf32>
    %c0_76 = arith.constant 0 : index
    %c128 = arith.constant 128 : index
    %224 = vector.load %arg9[%c0_76, %c128] : memref<1x2560xf32, #tpu.memory_space<vmem>>, vector<1x128xf32>
    tpu.vector_store %arg9[%c0_76, %c128], %223 {strides = array<i32>} : memref<1x2560xf32, #tpu.memory_space<vmem>>, vector<1x128xf32>,
    %225 = vector.extract_strided_slice %220 {offsets = [2, 0], sizes = [1, 128], strides = [1, 1]} : vector<20x128xf32> to vector<1x128xf32>
    %c0_77 = arith.constant 0 : index
    %c256 = arith.constant 256 : index
    %226 = vector.load %arg9[%c0_77, %c256] : memref<1x2560xf32, #tpu.memory_space<vmem>>, vector<1x128xf32>
    tpu.vector_store %arg9[%c0_77, %c256], %225 {strides = array<i32>} : memref<1x2560xf32, #tpu.memory_space<vmem>>, vector<1x128xf32>,
    %227 = vector.extract_strided_slice %220 {offsets = [3, 0], sizes = [1, 128], strides = [1, 1]} : vector<20x128xf32> to vector<1x128xf32>
    %c0_78 = arith.constant 0 : index
    %c384 = arith.constant 384 : index
    %228 = vector.load %arg9[%c0_78, %c384] : memref<1x2560xf32, #tpu.memory_space<vmem>>, vector<1x128xf32>
    tpu.vector_store %arg9[%c0_78, %c384], %227 {strides = array<i32>} : memref<1x2560xf32, #tpu.memory_space<vmem>>, vector<1x128xf32>,
    %229 = vector.extract_strided_slice %220 {offsets = [4, 0], sizes = [1, 128], strides = [1, 1]} : vector<20x128xf32> to vector<1x128xf32>
    %c0_79 = arith.constant 0 : index
    %c512 = arith.constant 512 : index
    %230 = vector.load %arg9[%c0_79, %c512] : memref<1x2560xf32, #tpu.memory_space<vmem>>, vector<1x128xf32>
    tpu.vector_store %arg9[%c0_79, %c512], %229 {strides = array<i32>} : memref<1x2560xf32, #tpu.memory_space<vmem>>, vector<1x128xf32>,
    %231 = vector.extract_strided_slice %220 {offsets = [5, 0], sizes = [1, 128], strides = [1, 1]} : vector<20x128xf32> to vector<1x128xf32>
    %c0_80 = arith.constant 0 : index
    %c640 = arith.constant 640 : index
    %232 = vector.load %arg9[%c0_80, %c640] : memref<1x2560xf32, #tpu.memory_space<vmem>>, vector<1x128xf32>
    tpu.vector_store %arg9[%c0_80, %c640], %231 {strides = array<i32>} : memref<1x2560xf32, #tpu.memory_space<vmem>>, vector<1x128xf32>,
    %233 = vector.extract_strided_slice %220 {offsets = [6, 0], sizes = [1, 128], strides = [1, 1]} : vector<20x128xf32> to vector<1x128xf32>
    %c0_81 = arith.constant 0 : index
    %c768 = arith.constant 768 : index
    %234 = vector.load %arg9[%c0_81, %c768] : memref<1x2560xf32, #tpu.memory_space<vmem>>, vector<1x128xf32>
    tpu.vector_store %arg9[%c0_81, %c768], %233 {strides = array<i32>} : memref<1x2560xf32, #tpu.memory_space<vmem>>, vector<1x128xf32>,
    %235 = vector.extract_strided_slice %220 {offsets = [7, 0], sizes = [1, 128], strides = [1, 1]} : vector<20x128xf32> to vector<1x128xf32>
    %c0_82 = arith.constant 0 : index
    %c896 = arith.constant 896 : index
    %236 = vector.load %arg9[%c0_82, %c896] : memref<1x2560xf32, #tpu.memory_space<vmem>>, vector<1x128xf32>
    tpu.vector_store %arg9[%c0_82, %c896], %235 {strides = array<i32>} : memref<1x2560xf32, #tpu.memory_space<vmem>>, vector<1x128xf32>,
    %237 = vector.extract_strided_slice %220 {offsets = [8, 0], sizes = [1, 128], strides = [1, 1]} : vector<20x128xf32> to vector<1x128xf32>
    %c0_83 = arith.constant 0 : index
    %c1024 = arith.constant 1024 : index
    %238 = vector.load %arg9[%c0_83, %c1024] : memref<1x2560xf32, #tpu.memory_space<vmem>>, vector<1x128xf32>
    tpu.vector_store %arg9[%c0_83, %c1024], %237 {strides = array<i32>} : memref<1x2560xf32, #tpu.memory_space<vmem>>, vector<1x128xf32>,
    %239 = vector.extract_strided_slice %220 {offsets = [9, 0], sizes = [1, 128], strides = [1, 1]} : vector<20x128xf32> to vector<1x128xf32>
    %c0_84 = arith.constant 0 : index
    %c1152 = arith.constant 1152 : index
    %240 = vector.load %arg9[%c0_84, %c1152] : memref<1x2560xf32, #tpu.memory_space<vmem>>, vector<1x128xf32>
    tpu.vector_store %arg9[%c0_84, %c1152], %239 {strides = array<i32>} : memref<1x2560xf32, #tpu.memory_space<vmem>>, vector<1x128xf32>,
    %241 = vector.extract_strided_slice %220 {offsets = [10, 0], sizes = [1, 128], strides = [1, 1]} : vector<20x128xf32> to vector<1x128xf32>
    %c0_85 = arith.constant 0 : index
    %c1280 = arith.constant 1280 : index
    %242 = vector.load %arg9[%c0_85, %c1280] : memref<1x2560xf32, #tpu.memory_space<vmem>>, vector<1x128xf32>
    tpu.vector_store %arg9[%c0_85, %c1280], %241 {strides = array<i32>} : memref<1x2560xf32, #tpu.memory_space<vmem>>, vector<1x128xf32>,
    %243 = vector.extract_strided_slice %220 {offsets = [11, 0], sizes = [1, 128], strides = [1, 1]} : vector<20x128xf32> to vector<1x128xf32>
    %c0_86 = arith.constant 0 : index
    %c1408 = arith.constant 1408 : index
    %244 = vector.load %arg9[%c0_86, %c1408] : memref<1x2560xf32, #tpu.memory_space<vmem>>, vector<1x128xf32>
    tpu.vector_store %arg9[%c0_86, %c1408], %243 {strides = array<i32>} : memref<1x2560xf32, #tpu.memory_space<vmem>>, vector<1x128xf32>,
    %245 = vector.extract_strided_slice %220 {offsets = [12, 0], sizes = [1, 128], strides = [1, 1]} : vector<20x128xf32> to vector<1x128xf32>
    %c0_87 = arith.constant 0 : index
    %c1536 = arith.constant 1536 : index
    %246 = vector.load %arg9[%c0_87, %c1536] : memref<1x2560xf32, #tpu.memory_space<vmem>>, vector<1x128xf32>
    tpu.vector_store %arg9[%c0_87, %c1536], %245 {strides = array<i32>} : memref<1x2560xf32, #tpu.memory_space<vmem>>, vector<1x128xf32>,
    %247 = vector.extract_strided_slice %220 {offsets = [13, 0], sizes = [1, 128], strides = [1, 1]} : vector<20x128xf32> to vector<1x128xf32>
    %c0_88 = arith.constant 0 : index
    %c1664 = arith.constant 1664 : index
    %248 = vector.load %arg9[%c0_88, %c1664] : memref<1x2560xf32, #tpu.memory_space<vmem>>, vector<1x128xf32>
    tpu.vector_store %arg9[%c0_88, %c1664], %247 {strides = array<i32>} : memref<1x2560xf32, #tpu.memory_space<vmem>>, vector<1x128xf32>,
    %249 = vector.extract_strided_slice %220 {offsets = [14, 0], sizes = [1, 128], strides = [1, 1]} : vector<20x128xf32> to vector<1x128xf32>
    %c0_89 = arith.constant 0 : index
    %c1792 = arith.constant 1792 : index
    %250 = vector.load %arg9[%c0_89, %c1792] : memref<1x2560xf32, #tpu.memory_space<vmem>>, vector<1x128xf32>
    tpu.vector_store %arg9[%c0_89, %c1792], %249 {strides = array<i32>} : memref<1x2560xf32, #tpu.memory_space<vmem>>, vector<1x128xf32>,
    %251 = vector.extract_strided_slice %220 {offsets = [15, 0], sizes = [1, 128], strides = [1, 1]} : vector<20x128xf32> to vector<1x128xf32>
    %c0_90 = arith.constant 0 : index
    %c1920 = arith.constant 1920 : index
    %252 = vector.load %arg9[%c0_90, %c1920] : memref<1x2560xf32, #tpu.memory_space<vmem>>, vector<1x128xf32>
    tpu.vector_store %arg9[%c0_90, %c1920], %251 {strides = array<i32>} : memref<1x2560xf32, #tpu.memory_space<vmem>>, vector<1x128xf32>,
    %253 = vector.extract_strided_slice %220 {offsets = [16, 0], sizes = [1, 128], strides = [1, 1]} : vector<20x128xf32> to vector<1x128xf32>
    %c0_91 = arith.constant 0 : index
    %c2048 = arith.constant 2048 : index
    %254 = vector.load %arg9[%c0_91, %c2048] : memref<1x2560xf32, #tpu.memory_space<vmem>>, vector<1x128xf32>
    tpu.vector_store %arg9[%c0_91, %c2048], %253 {strides = array<i32>} : memref<1x2560xf32, #tpu.memory_space<vmem>>, vector<1x128xf32>,
    %255 = vector.extract_strided_slice %220 {offsets = [17, 0], sizes = [1, 128], strides = [1, 1]} : vector<20x128xf32> to vector<1x128xf32>
    %c0_92 = arith.constant 0 : index
    %c2176 = arith.constant 2176 : index
    %256 = vector.load %arg9[%c0_92, %c2176] : memref<1x2560xf32, #tpu.memory_space<vmem>>, vector<1x128xf32>
    tpu.vector_store %arg9[%c0_92, %c2176], %255 {strides = array<i32>} : memref<1x2560xf32, #tpu.memory_space<vmem>>, vector<1x128xf32>,
    %257 = vector.extract_strided_slice %220 {offsets = [18, 0], sizes = [1, 128], strides = [1, 1]} : vector<20x128xf32> to vector<1x128xf32>
    %c0_93 = arith.constant 0 : index
    %c2304 = arith.constant 2304 : index
    %258 = vector.load %arg9[%c0_93, %c2304] : memref<1x2560xf32, #tpu.memory_space<vmem>>, vector<1x128xf32>
    tpu.vector_store %arg9[%c0_93, %c2304], %257 {strides = array<i32>} : memref<1x2560xf32, #tpu.memory_space<vmem>>, vector<1x128xf32>,
    %259 = vector.extract_strided_slice %220 {offsets = [19, 0], sizes = [1, 128], strides = [1, 1]} : vector<20x128xf32> to vector<1x128xf32>
    %c0_94 = arith.constant 0 : index
    %c2432 = arith.constant 2432 : index
    %260 = vector.load %arg9[%c0_94, %c2432] : memref<1x2560xf32, #tpu.memory_space<vmem>>, vector<1x128xf32>
    tpu.vector_store %arg9[%c0_94, %c2432], %259 {strides = array<i32>} : memref<1x2560xf32, #tpu.memory_space<vmem>>, vector<1x128xf32>,
    %c0_95 = arith.constant 0 : index
    %c0_96 = arith.constant 0 : index
    %261 = vector.load %arg6[%c0_95, %c0_96] : memref<320x128xf32, #tpu.memory_space<vmem>>, vector<320x128xf32>
    %c0_97 = arith.constant 0 : index
    %c0_98 = arith.constant 0 : index
    %262 = vector.load %arg7[%c0_97, %c0_98] : memref<1x128xf32, #tpu.memory_space<vmem>>, vector<1x128xf32>
    %c0_99 = arith.constant 0 : index
    %c0_100 = arith.constant 0 : index
    %263 = vector.load %arg9[%c0_99, %c0_100] : memref<1x2560xf32, #tpu.memory_space<vmem>>, vector<1x320xf32>
    %cst_101 = arith.constant dense<0.000000e+00> : vector<1x128xf32>
    %264 = tpu.matmul %263, %261, %cst_101 {dimension_numbers = #tpu.dot_dimension_numbers<[1], [0], [0], [1], [0, 0, 1, 1], [], []>} : vector<1x320xf32>, vector<320x128xf32>, vector<1x128xf32> -> vector<1x128xf32>
    %265 = arith.addf %264, %262 : vector<1x128xf32>
    %c0_102 = arith.constant 0 : index
    %c0_103 = arith.constant 0 : index
    %266 = vector.load %arg8[%c0_102, %c0_103] : memref<8x128xf32, #tpu.memory_space<vmem>>, vector<1x128xf32>
    tpu.vector_store %arg8[%c0_102, %c0_103], %265 {strides = array<i32>} : memref<8x128xf32, #tpu.memory_space<vmem>>, vector<1x128xf32>,
    %c0_104 = arith.constant 0 : index
    %c320 = arith.constant 320 : index
    %267 = vector.load %arg9[%c0_104, %c320] : memref<1x2560xf32, #tpu.memory_space<vmem>>, vector<1x320xf32>
    %cst_105 = arith.constant dense<0.000000e+00> : vector<1x128xf32>
    %268 = tpu.matmul %267, %261, %cst_105 {dimension_numbers = #tpu.dot_dimension_numbers<[1], [0], [0], [1], [0, 0, 1, 1], [], []>} : vector<1x320xf32>, vector<320x128xf32>, vector<1x128xf32> -> vector<1x128xf32>
    %269 = arith.addf %268, %262 : vector<1x128xf32>
    %c1_106 = arith.constant 1 : index
    %c0_107 = arith.constant 0 : index
    %270 = vector.load %arg8[%c1_106, %c0_107] : memref<8x128xf32, #tpu.memory_space<vmem>>, vector<1x128xf32>
    tpu.vector_store %arg8[%c1_106, %c0_107], %269 {strides = array<i32>} : memref<8x128xf32, #tpu.memory_space<vmem>>, vector<1x128xf32>,
    %c0_108 = arith.constant 0 : index
    %c640_109 = arith.constant 640 : index
    %271 = vector.load %arg9[%c0_108, %c640_109] : memref<1x2560xf32, #tpu.memory_space<vmem>>, vector<1x320xf32>
    %cst_110 = arith.constant dense<0.000000e+00> : vector<1x128xf32>
    %272 = tpu.matmul %271, %261, %cst_110 {dimension_numbers = #tpu.dot_dimension_numbers<[1], [0], [0], [1], [0, 0, 1, 1], [], []>} : vector<1x320xf32>, vector<320x128xf32>, vector<1x128xf32> -> vector<1x128xf32>
    %273 = arith.addf %272, %262 : vector<1x128xf32>
    %c2_111 = arith.constant 2 : index
    %c0_112 = arith.constant 0 : index
    %274 = vector.load %arg8[%c2_111, %c0_112] : memref<8x128xf32, #tpu.memory_space<vmem>>, vector<1x128xf32>
    tpu.vector_store %arg8[%c2_111, %c0_112], %273 {strides = array<i32>} : memref<8x128xf32, #tpu.memory_space<vmem>>, vector<1x128xf32>,
    %c0_113 = arith.constant 0 : index
    %c960 = arith.constant 960 : index
    %275 = vector.load %arg9[%c0_113, %c960] : memref<1x2560xf32, #tpu.memory_space<vmem>>, vector<1x320xf32>
    %cst_114 = arith.constant dense<0.000000e+00> : vector<1x128xf32>
    %276 = tpu.matmul %275, %261, %cst_114 {dimension_numbers = #tpu.dot_dimension_numbers<[1], [0], [0], [1], [0, 0, 1, 1], [], []>} : vector<1x320xf32>, vector<320x128xf32>, vector<1x128xf32> -> vector<1x128xf32>
    %277 = arith.addf %276, %262 : vector<1x128xf32>
    %c3_115 = arith.constant 3 : index
    %c0_116 = arith.constant 0 : index
    %278 = vector.load %arg8[%c3_115, %c0_116] : memref<8x128xf32, #tpu.memory_space<vmem>>, vector<1x128xf32>
    tpu.vector_store %arg8[%c3_115, %c0_116], %277 {strides = array<i32>} : memref<8x128xf32, #tpu.memory_space<vmem>>, vector<1x128xf32>,
    %c0_117 = arith.constant 0 : index
    %c1280_118 = arith.constant 1280 : index
    %279 = vector.load %arg9[%c0_117, %c1280_118] : memref<1x2560xf32, #tpu.memory_space<vmem>>, vector<1x320xf32>
    %cst_119 = arith.constant dense<0.000000e+00> : vector<1x128xf32>
    %280 = tpu.matmul %279, %261, %cst_119 {dimension_numbers = #tpu.dot_dimension_numbers<[1], [0], [0], [1], [0, 0, 1, 1], [], []>} : vector<1x320xf32>, vector<320x128xf32>, vector<1x128xf32> -> vector<1x128xf32>
    %281 = arith.addf %280, %262 : vector<1x128xf32>
    %c4_120 = arith.constant 4 : index
    %c0_121 = arith.constant 0 : index
    %282 = vector.load %arg8[%c4_120, %c0_121] : memref<8x128xf32, #tpu.memory_space<vmem>>, vector<1x128xf32>
    tpu.vector_store %arg8[%c4_120, %c0_121], %281 {strides = array<i32>} : memref<8x128xf32, #tpu.memory_space<vmem>>, vector<1x128xf32>,
    %c0_122 = arith.constant 0 : index
    %c1600 = arith.constant 1600 : index
    %283 = vector.load %arg9[%c0_122, %c1600] : memref<1x2560xf32, #tpu.memory_space<vmem>>, vector<1x320xf32>
    %cst_123 = arith.constant dense<0.000000e+00> : vector<1x128xf32>
    %284 = tpu.matmul %283, %261, %cst_123 {dimension_numbers = #tpu.dot_dimension_numbers<[1], [0], [0], [1], [0, 0, 1, 1], [], []>} : vector<1x320xf32>, vector<320x128xf32>, vector<1x128xf32> -> vector<1x128xf32>
    %285 = arith.addf %284, %262 : vector<1x128xf32>
    %c5_124 = arith.constant 5 : index
    %c0_125 = arith.constant 0 : index
    %286 = vector.load %arg8[%c5_124, %c0_125] : memref<8x128xf32, #tpu.memory_space<vmem>>, vector<1x128xf32>
    tpu.vector_store %arg8[%c5_124, %c0_125], %285 {strides = array<i32>} : memref<8x128xf32, #tpu.memory_space<vmem>>, vector<1x128xf32>,
    %c0_126 = arith.constant 0 : index
    %c1920_127 = arith.constant 1920 : index
    %287 = vector.load %arg9[%c0_126, %c1920_127] : memref<1x2560xf32, #tpu.memory_space<vmem>>, vector<1x320xf32>
    %cst_128 = arith.constant dense<0.000000e+00> : vector<1x128xf32>
    %288 = tpu.matmul %287, %261, %cst_128 {dimension_numbers = #tpu.dot_dimension_numbers<[1], [0], [0], [1], [0, 0, 1, 1], [], []>} : vector<1x320xf32>, vector<320x128xf32>, vector<1x128xf32> -> vector<1x128xf32>
    %289 = arith.addf %288, %262 : vector<1x128xf32>
    %c6_129 = arith.constant 6 : index
    %c0_130 = arith.constant 0 : index
    %290 = vector.load %arg8[%c6_129, %c0_130] : memref<8x128xf32, #tpu.memory_space<vmem>>, vector<1x128xf32>
    tpu.vector_store %arg8[%c6_129, %c0_130], %289 {strides = array<i32>} : memref<8x128xf32, #tpu.memory_space<vmem>>, vector<1x128xf32>,
    %c0_131 = arith.constant 0 : index
    %c2240 = arith.constant 2240 : index
    %291 = vector.load %arg9[%c0_131, %c2240] : memref<1x2560xf32, #tpu.memory_space<vmem>>, vector<1x320xf32>
    %cst_132 = arith.constant dense<0.000000e+00> : vector<1x128xf32>
    %292 = tpu.matmul %291, %261, %cst_132 {dimension_numbers = #tpu.dot_dimension_numbers<[1], [0], [0], [1], [0, 0, 1, 1], [], []>} : vector<1x320xf32>, vector<320x128xf32>, vector<1x128xf32> -> vector<1x128xf32>
    %293 = arith.addf %292, %262 : vector<1x128xf32>
    %c7_133 = arith.constant 7 : index
    %c0_134 = arith.constant 0 : index
    %294 = vector.load %arg8[%c7_133, %c0_134] : memref<8x128xf32, #tpu.memory_space<vmem>>, vector<1x128xf32>
    tpu.vector_store %arg8[%c7_133, %c0_134], %293 {strides = array<i32>} : memref<8x128xf32, #tpu.memory_space<vmem>>, vector<1x128xf32>,
    return
  }
}

</mosaic_0001>

<llo_original>
// kernel: ann_classifier_forward.1
$region0: #{ann_classifier_forward.1}
  #allocation0 [shape = 'u32[]', space=smem, size = 0x4, offset = 0x4, fixed_abs, tag = 'smem constant byte address 0x4 - core index']
  #allocation1 [shape = 'u32[144,128]{1,0:T(1,128)}', space=vmem, size = 0x12000, scoped, tag = 'internal scratch']
  #allocation2 [shape = 'f32[1,2560]{1,0:T(1,128)}', space=vmem, size = 0x2800, scoped, tag = 'scratch operand']
  %s0 = inlined_call_operand.vmem [shape: f32[4,128], index: 0, kind: input, shape index: {}]
  %s1 = inlined_call_operand.vmem [shape: f32[20,128], index: 1, kind: input, shape index: {}]
  %s2 = inlined_call_operand.vmem [shape: f32[20,128], index: 2, kind: input, shape index: {}]
  %s3 = inlined_call_operand.vmem [shape: f32[20,128], index: 3, kind: input, shape index: {}]
  %s4 = inlined_call_operand.vmem [shape: f32[9,20,128], index: 4, kind: input, shape index: {}]
  %s5 = inlined_call_operand.vmem [shape: f32[9,128], index: 5, kind: input, shape index: {}]
  %s6 = inlined_call_operand.vmem [shape: f32[320,128], index: 6, kind: input, shape index: {}]
  %s7 = inlined_call_operand.vmem [shape: f32[1,128], index: 7, kind: input, shape index: {}]
  %s8 = inlined_call_operand.vmem [shape: f32[8,128], index: 8, kind: output, shape index: {}]
  %s9 = sld [smem:[#allocation0]]
  $region42: #{ann_classifier_forward.1} parent=0
    _
  %s11 = ssub.s32 1, %s9
  %s12 = scalar_select 0, %s11, %s9
  // Predicated region
  $region2: #{ann_classifier_forward.1} parent=0 // pred_check
    _
  $region3: #{ann_classifier_forward.1} parent=0 // pred_check_branch
    %14 = sbr.rel (0) target = $region5
  $region4: #{ann_classifier_forward.1} parent=0 // pred_region
    _
  $region5: #{ann_classifier_forward.1} parent=0 // pred_fallthru
    _
  // Predicated region
  $region6: #{ann_classifier_forward.1} parent=0 // pred_check
    _
  $region7: #{ann_classifier_forward.1} parent=0 // pred_check_branch
    %16 = sbr.rel (0) target = $region9
  $region8: #{ann_classifier_forward.1} parent=0 // pred_region
    _
  $region9: #{ann_classifier_forward.1} parent=0 // pred_fallthru
    _
  // Predicated region
  $region10: #{ann_classifier_forward.1} parent=0 // pred_check
    _
  $region11: #{ann_classifier_forward.1} parent=0 // pred_check_branch
    %18 = sbr.rel (0) target = $region13
  $region12: #{ann_classifier_forward.1} parent=0 // pred_region
    _
  $region13: #{ann_classifier_forward.1} parent=0 // pred_fallthru
    _
  // Predicated region
  $region14: #{ann_classifier_forward.1} parent=0 // pred_check
    _
  $region15: #{ann_classifier_forward.1} parent=0 // pred_check_branch
    %20 = sbr.rel (0) target = $region17
  $region16: #{ann_classifier_forward.1} parent=0 // pred_region
    _
  $region17: #{ann_classifier_forward.1} parent=0 // pred_fallthru
    _
  // Predicated region
  $region18: #{ann_classifier_forward.1} parent=0 // pred_check
    _
  $region19: #{ann_classifier_forward.1} parent=0 // pred_check_branch
    %22 = sbr.rel (0) target = $region21
  $region20: #{ann_classifier_forward.1} parent=0 // pred_region
    _
  $region21: #{ann_classifier_forward.1} parent=0 // pred_fallthru
    _
  // Predicated region
  $region22: #{ann_classifier_forward.1} parent=0 // pred_check
    _
  $region23: #{ann_classifier_forward.1} parent=0 // pred_check_branch
    %24 = sbr.rel (0) target = $region25
  $region24: #{ann_classifier_forward.1} parent=0 // pred_region
    _
  $region25: #{ann_classifier_forward.1} parent=0 // pred_fallthru
    _
  // Predicated region
  $region26: #{ann_classifier_forward.1} parent=0 // pred_check
    _
  $region27: #{ann_classifier_forward.1} parent=0 // pred_check_branch
    %26 = sbr.rel (0) target = $region29
  $region28: #{ann_classifier_forward.1} parent=0 // pred_region
    _
  $region29: #{ann_classifier_forward.1} parent=0 // pred_fallthru
    _
  // Predicated region
  $region30: #{ann_classifier_forward.1} parent=0 // pred_check
    _
  $region31: #{ann_classifier_forward.1} parent=0 // pred_check_branch
    %28 = sbr.rel (0) target = $region33
  $region32: #{ann_classifier_forward.1} parent=0 // pred_region
    _
  $region33: #{ann_classifier_forward.1} parent=0 // pred_fallthru
    _
  %v29 = vld [vmem:[%s0] sm:$0xf]
  %vm30 = vcmask 1043456
  %v31 = vsel %vm30, %v29, -inf
  %v32 = vrot.slane %v31, 4
  %v33 = vmax.f32 %v31, %v32
  %v34 = vrot.slane %v33, 2
  %v35 = vmax.f32 %v33, %v34
  %v36 = vrot.slane %v35, 1
  %v37 = vmax.f32 %v35, %v36
  %38 = vrot.lane.b32.xlu0 %v37, 17
  %v39 = vpop.permute.xlu0 %38
  %v40 = vld [vmem:[%s5] sm:$0x1]
  %v41 = vmul.f32 %v39, %v40
  %42 = vrot.lane.b32.xlu0 %v37, 16
  %v43 = vpop.permute.xlu0 %42
  %v44 = vld [vmem:[%s5 + $0x1] sm:$0x1]
  %v45 = vmul.f32 %v43, %v44
  %46 = vrot.lane.b32.xlu0 %v37, 15
  %v47 = vpop.permute.xlu0 %46
  %v48 = vld [vmem:[%s5 + $0x2] sm:$0x1]
  %v49 = vmul.f32 %v47, %v48
  %50 = vrot.lane.b32.xlu0 %v37, 1
  %v51 = vpop.permute.xlu0 %50
  %v52 = vld [vmem:[%s5 + $0x3] sm:$0x1]
  %v53 = vmul.f32 %v51, %v52
  %v54 = vld [vmem:[%s5 + $0x4] sm:$0x1]
  %v55 = vmul.f32 %v37, %v54
  %56 = vrot.lane.b32.xlu0 %v37, 127
  %v57 = vpop.permute.xlu0 %56
  %v58 = vld [vmem:[%s5 + $0x5] sm:$0x1]
  %v59 = vmul.f32 %v57, %v58
  %60 = vrot.lane.b32.xlu0 %v37, 113
  %v61 = vpop.permute.xlu0 %60
  %v62 = vld [vmem:[%s5 + $0x6] sm:$0x1]
  %v63 = vmul.f32 %v61, %v62
  %64 = vrot.lane.b32.xlu0 %v37, 112
  %v65 = vpop.permute.xlu0 %64
  %v66 = vld [vmem:[%s5 + $0x7] sm:$0x1]
  %v67 = vmul.f32 %v65, %v66
  %68 = vrot.lane.b32.xlu0 %v37, 111
  %v69 = vpop.permute.xlu0 %68
  %v70 = vld [vmem:[%s5 + $0x8] sm:$0x1]
  %v71 = vmul.f32 %v69, %v70
  %v72 = vld [vmem:[%s1] sm:$0xff]
  %v73 = vld [vmem:[%s1 + $0x8] sm:$0xff]
  %v74 = vld [vmem:[%s1 + $0x10] sm:$0xf]
  %v75 = vmul.f32 %v72, %v37
  %v76 = vmul.f32 %v73, %v37
  %v77 = vmul.f32 %v74, %v37
  %v78 = vld [vmem:[%s2] sm:$0xff]
  %v79 = vld [vmem:[%s2 + $0x8] sm:$0xff]
  %v80 = vld [vmem:[%s2 + $0x10] sm:$0xf]
  %v81 = vlaneseq
  %v82 = vshrl.u32 %v81, 7
  %v83 = vsub.s32 0, %v82
  %v84 = vrot.slane %v41, %v83
  %v85 = vmul.f32 %v78, %v84
  %v86 = vmul.f32 %v79, %v84
  %v87 = vmul.f32 %v80, %v84
  %v88 = vld [vmem:[%s4] sm:$0xff]
  %v89 = vld [vmem:[%s4 + $0x8] sm:$0xff]
  %v90 = vld [vmem:[%s4 + $0x10] sm:$0xf]
  %v91 = vadd.f32 %v85, %v88
  %v92 = vadd.f32 %v86, %v89
  %v93 = vadd.f32 %v87, %v90
  %v94 = vmul.f32 %v75, %v91
  %v95 = vmul.f32 %v76, %v92
  %v96 = vmul.f32 %v77, %v93
  %v97 = vlaneseq
  %v98 = vshrl.u32 %v97, 7
  %v99 = vsub.s32 0, %v98
  %v100 = vrot.slane %v45, %v99
  %v101 = vmul.f32 %v78, %v100
  %v102 = vmul.f32 %v79, %v100
  %v103 = vmul.f32 %v80, %v100
  %s104 = scalar_lea.vmem %s4, 24
  %v105 = vld [vmem:[%s104] sm:$0xff]
  %v106 = vld [vmem:[%s104 + $0x8] sm:$0xff]
  %v107 = vld [vmem:[%s104 + $0x10] sm:$0xf]
  %v108 = vadd.f32 %v101, %v105
  %v109 = vadd.f32 %v102, %v106
  %v110 = vadd.f32 %v103, %v107
  %v111 = vmul.f32 %v75, %v108
  %v112 = vmul.f32 %v76, %v109
  %v113 = vmul.f32 %v77, %v110
  %v114 = vmax.f32 %v94, %v111
  %v115 = vmax.f32 %v95, %v112
  %v116 = vmax.f32 %v96, %v113
  %v117 = vlaneseq
  %v118 = vshrl.u32 %v117, 7
  %v119 = vsub.s32 0, %v118
  %v120 = vrot.slane %v49, %v119
  %v121 = vmul.f32 %v78, %v120
  %v122 = vmul.f32 %v79, %v120
  %v123 = vmul.f32 %v80, %v120
  %s124 = scalar_lea.vmem %s4, 48
  %v125 = vld [vmem:[%s124] sm:$0xff]
  %v126 = vld [vmem:[%s124 + $0x8] sm:$0xff]
  %v127 = vld [vmem:[%s124 + $0x10] sm:$0xf]
  %v128 = vadd.f32 %v121, %v125
  %v129 = vadd.f32 %v122, %v126
  %v130 = vadd.f32 %v123, %v127
  %v131 = vmul.f32 %v75, %v128
  %v132 = vmul.f32 %v76, %v129
  %v133 = vmul.f32 %v77, %v130
  %v134 = vmax.f32 %v114, %v131
  %v135 = vmax.f32 %v115, %v132
  %v136 = vmax.f32 %v116, %v133
  %v137 = vlaneseq
  %v138 = vshrl.u32 %v137, 7
  %v139 = vsub.s32 0, %v138
  %v140 = vrot.slane %v53, %v139
  %v141 = vmul.f32 %v78, %v140
  %v142 = vmul.f32 %v79, %v140
  %v143 = vmul.f32 %v80, %v140
  %s144 = scalar_lea.vmem %s4, 72
  %v145 = vld [vmem:[%s144] sm:$0xff]
  %v146 = vld [vmem:[%s144 + $0x8] sm:$0xff]
  %v147 = vld [vmem:[%s144 + $0x10] sm:$0xf]
  %v148 = vadd.f32 %v141, %v145
  %v149 = vadd.f32 %v142, %v146
  %v150 = vadd.f32 %v143, %v147
  %v151 = vmul.f32 %v75, %v148
  %v152 = vmul.f32 %v76, %v149
  %v153 = vmul.f32 %v77, %v150
  %v154 = vmax.f32 %v134, %v151
  %v155 = vmax.f32 %v135, %v152
  %v156 = vmax.f32 %v136, %v153
  %v157 = vlaneseq
  %v158 = vshrl.u32 %v157, 7
  %v159 = vsub.s32 0, %v158
  %v160 = vrot.slane %v55, %v159
  %v161 = vmul.f32 %v78, %v160
  %v162 = vmul.f32 %v79, %v160
  %v163 = vmul.f32 %v80, %v160
  %s164 = scalar_lea.vmem %s4, 96
  %v165 = vld [vmem:[%s164] sm:$0xff]
  %v166 = vld [vmem:[%s164 + $0x8] sm:$0xff]
  %v167 = vld [vmem:[%s164 + $0x10] sm:$0xf]
  %v168 = vadd.f32 %v161, %v165
  %v169 = vadd.f32 %v162, %v166
  %v170 = vadd.f32 %v163, %v167
  %v171 = vmul.f32 %v75, %v168
  %v172 = vmul.f32 %v76, %v169
  %v173 = vmul.f32 %v77, %v170
  %v174 = vmax.f32 %v154, %v171
  %v175 = vmax.f32 %v155, %v172
  %v176 = vmax.f32 %v156, %v173
  %v177 = vlaneseq
  %v178 = vshrl.u32 %v177, 7
  %v179 = vsub.s32 0, %v178
  %v180 = vrot.slane %v59, %v179
  %v181 = vmul.f32 %v78, %v180
  %v182 = vmul.f32 %v79, %v180
  %v183 = vmul.f32 %v80, %v180
  %s184 = scalar_lea.vmem %s4, 120
  %v185 = vld [vmem:[%s184] sm:$0xff]
  %v186 = vld [vmem:[%s184 + $0x8] sm:$0xff]
  %v187 = vld [vmem:[%s184 + $0x10] sm:$0xf]
  %v188 = vadd.f32 %v181, %v185
  %v189 = vadd.f32 %v182, %v186
  %v190 = vadd.f32 %v183, %v187
  %v191 = vmul.f32 %v75, %v188
  %v192 = vmul.f32 %v76, %v189
  %v193 = vmul.f32 %v77, %v190
  %v194 = vmax.f32 %v174, %v191
  %v195 = vmax.f32 %v175, %v192
  %v196 = vmax.f32 %v176, %v193
  %v197 = vlaneseq
  %v198 = vshrl.u32 %v197, 7
  %v199 = vsub.s32 0, %v198
  %v200 = vrot.slane %v63, %v199
  %v201 = vmul.f32 %v78, %v200
  %v202 = vmul.f32 %v79, %v200
  %v203 = vmul.f32 %v80, %v200
  %s204 = scalar_lea.vmem %s4, 144
  %v205 = vld [vmem:[%s204] sm:$0xff]
  %v206 = vld [vmem:[%s204 + $0x8] sm:$0xff]
  %v207 = vld [vmem:[%s204 + $0x10] sm:$0xf]
  %v208 = vadd.f32 %v201, %v205
  %v209 = vadd.f32 %v202, %v206
  %v210 = vadd.f32 %v203, %v207
  %v211 = vmul.f32 %v75, %v208
  %v212 = vmul.f32 %v76, %v209
  %v213 = vmul.f32 %v77, %v210
  %v214 = vmax.f32 %v194, %v211
  %v215 = vmax.f32 %v195, %v212
  %v216 = vmax.f32 %v196, %v213
  %v217 = vlaneseq
  %v218 = vshrl.u32 %v217, 7
  %v219 = vsub.s32 0, %v218
  %v220 = vrot.slane %v67, %v219
  %v221 = vmul.f32 %v78, %v220
  %v222 = vmul.f32 %v79, %v220
  %v223 = vmul.f32 %v80, %v220
  %s224 = scalar_lea.vmem %s4, 168
  %v225 = vld [vmem:[%s224] sm:$0xff]
  %v226 = vld [vmem:[%s224 + $0x8] sm:$0xff]
  %v227 = vld [vmem:[%s224 + $0x10] sm:$0xf]
  %v228 = vadd.f32 %v221, %v225
  %v229 = vadd.f32 %v222, %v226
  %v230 = vadd.f32 %v223, %v227
  %v231 = vmul.f32 %v75, %v228
  %v232 = vmul.f32 %v76, %v229
  %v233 = vmul.f32 %v77, %v230
  %v234 = vmax.f32 %v214, %v231
  %v235 = vmax.f32 %v215, %v232
  %v236 = vmax.f32 %v216, %v233
  %v237 = vlaneseq
  %v238 = vshrl.u32 %v237, 7
  %v239 = vsub.s32 0, %v238
  %v240 = vrot.slane %v71, %v239
  %v241 = vmul.f32 %v78, %v240
  %v242 = vmul.f32 %v79, %v240
  %v243 = vmul.f32 %v80, %v240
  %s244 = scalar_lea.vmem %s4, 192
  %v245 = vld [vmem:[%s244] sm:$0xff]
  %v246 = vld [vmem:[%s244 + $0x8] sm:$0xff]
  %v247 = vld [vmem:[%s244 + $0x10] sm:$0xf]
  %v248 = vadd.f32 %v241, %v245
  %v249 = vadd.f32 %v242, %v246
  %v250 = vadd.f32 %v243, %v247
  %v251 = vmul.f32 %v75, %v248
  %v252 = vmul.f32 %v76, %v249
  %v253 = vmul.f32 %v77, %v250
  %v254 = vmax.f32 %v234, %v251
  %v255 = vmax.f32 %v235, %v252
  %v256 = vmax.f32 %v236, %v253
  %v257 = vsub.f32 %v94, %v254
  %v258 = vsub.f32 %v95, %v255
  %v259 = vsub.f32 %v96, %v256
  %v260 = vmul.f32 %v257, 1.442695
  %v261 = vpow.pop %v260
  %v262 = vmul.f32 %v258, 1.442695
  %v263 = vpow.pop %v262
  %v264 = vmul.f32 %v259, 1.442695
  %v265 = vpow.pop %v264
  %v266 = vadd.f32 %v261, 0.0
  %v267 = vadd.f32 %v263, 0.0
  %v268 = vadd.f32 %v265, 0.0
  %v269 = vmul.f32 %v261, %v84
  %v270 = vmul.f32 %v263, %v84
  %v271 = vmul.f32 %v265, %v84
  %v272 = vadd.f32 %v269, 0.0
  %v273 = vadd.f32 %v270, 0.0
  %v274 = vadd.f32 %v271, 0.0
  %v275 = vsub.f32 %v111, %v254
  %v276 = vsub.f32 %v112, %v255
  %v277 = vsub.f32 %v113, %v256
  %v278 = vmul.f32 %v275, 1.442695
  %v279 = vpow.pop %v278
  %v280 = vmul.f32 %v276, 1.442695
  %v281 = vpow.pop %v280
  %v282 = vmul.f32 %v277, 1.442695
  %v283 = vpow.pop %v282
  %v284 = vadd.f32 %v266, %v279
  %v285 = vadd.f32 %v267, %v281
  %v286 = vadd.f32 %v268, %v283
  %v287 = vmul.f32 %v279, %v100
  %v288 = vmul.f32 %v281, %v100
  %v289 = vmul.f32 %v283, %v100
  %v290 = vadd.f32 %v272, %v287
  %v291 = vadd.f32 %v273, %v288
  %v292 = vadd.f32 %v274, %v289
  %v293 = vsub.f32 %v131, %v254
  %v294 = vsub.f32 %v132, %v255
  %v295 = vsub.f32 %v133, %v256
  %v296 = vmul.f32 %v293, 1.442695
  %v297 = vpow.pop %v296
  %v298 = vmul.f32 %v294, 1.442695
  %v299 = vpow.pop %v298
  %v300 = vmul.f32 %v295, 1.442695
  %v301 = vpow.pop %v300
  %v302 = vadd.f32 %v284, %v297
  %v303 = vadd.f32 %v285, %v299
  %v304 = vadd.f32 %v286, %v301
  %v305 = vmul.f32 %v297, %v120
  %v306 = vmul.f32 %v299, %v120
  %v307 = vmul.f32 %v301, %v120
  %v308 = vadd.f32 %v290, %v305
  %v309 = vadd.f32 %v291, %v306
  %v310 = vadd.f32 %v292, %v307
  %v311 = vsub.f32 %v151, %v254
  %v312 = vsub.f32 %v152, %v255
  %v313 = vsub.f32 %v153, %v256
  %v314 = vmul.f32 %v311, 1.442695
  %v315 = vpow.pop %v314
  %v316 = vmul.f32 %v312, 1.442695
  %v317 = vpow.pop %v316
  %v318 = vmul.f32 %v313, 1.442695
  %v319 = vpow.pop %v318
  %v320 = vadd.f32 %v302, %v315
  %v321 = vadd.f32 %v303, %v317
  %v322 = vadd.f32 %v304, %v319
  %v323 = vmul.f32 %v315, %v140
  %v324 = vmul.f32 %v317, %v140
  %v325 = vmul.f32 %v319, %v140
  %v326 = vadd.f32 %v308, %v323
  %v327 = vadd.f32 %v309, %v324
  %v328 = vadd.f32 %v310, %v325
  %v329 = vsub.f32 %v171, %v254
  %v330 = vsub.f32 %v172, %v255
  %v331 = vsub.f32 %v173, %v256
  %v332 = vmul.f32 %v329, 1.442695
  %v333 = vpow.pop %v332
  %v334 = vmul.f32 %v330, 1.442695
  %v335 = vpow.pop %v334
  %v336 = vmul.f32 %v331, 1.442695
  %v337 = vpow.pop %v336
  %v338 = vadd.f32 %v320, %v333
  %v339 = vadd.f32 %v321, %v335
  %v340 = vadd.f32 %v322, %v337
  %v341 = vmul.f32 %v333, %v160
  %v342 = vmul.f32 %v335, %v160
  %v343 = vmul.f32 %v337, %v160
  %v344 = vadd.f32 %v326, %v341
  %v345 = vadd.f32 %v327, %v342
  %v346 = vadd.f32 %v328, %v343
  %v347 = vsub.f32 %v191, %v254
  %v348 = vsub.f32 %v192, %v255
  %v349 = vsub.f32 %v193, %v256
  %v350 = vmul.f32 %v347, 1.442695
  %v351 = vpow.pop %v350
  %v352 = vmul.f32 %v348, 1.442695
  %v353 = vpow.pop %v352
  %v354 = vmul.f32 %v349, 1.442695
  %v355 = vpow.pop %v354
  %v356 = vadd.f32 %v338, %v351
  %v357 = vadd.f32 %v339, %v353
  %v358 = vadd.f32 %v340, %v355
  %v359 = vmul.f32 %v351, %v180
  %v360 = vmul.f32 %v353, %v180
  %v361 = vmul.f32 %v355, %v180
  %v362 = vadd.f32 %v344, %v359
  %v363 = vadd.f32 %v345, %v360
  %v364 = vadd.f32 %v346, %v361
  %v365 = vsub.f32 %v211, %v254
  %v366 = vsub.f32 %v212, %v255
  %v367 = vsub.f32 %v213, %v256
  %v368 = vmul.f32 %v365, 1.442695
  %v369 = vpow.pop %v368
  %v370 = vmul.f32 %v366, 1.442695
  %v371 = vpow.pop %v370
  %v372 = vmul.f32 %v367, 1.442695
  %v373 = vpow.pop %v372
  %v374 = vadd.f32 %v356, %v369
  %v375 = vadd.f32 %v357, %v371
  %v376 = vadd.f32 %v358, %v373
  %v377 = vmul.f32 %v369, %v200
  %v378 = vmul.f32 %v371, %v200
  %v379 = vmul.f32 %v373, %v200
  %v380 = vadd.f32 %v362, %v377
  %v381 = vadd.f32 %v363, %v378
  %v382 = vadd.f32 %v364, %v379
  %v383 = vsub.f32 %v231, %v254
  %v384 = vsub.f32 %v232, %v255
  %v385 = vsub.f32 %v233, %v256
  %v386 = vmul.f32 %v383, 1.442695
  %v387 = vpow.pop %v386
  %v388 = vmul.f32 %v384, 1.442695
  %v389 = vpow.pop %v388
  %v390 = vmul.f32 %v385, 1.442695
  %v391 = vpow.pop %v390
  %v392 = vadd.f32 %v374, %v387
  %v393 = vadd.f32 %v375, %v389
  %v394 = vadd.f32 %v376, %v391
  %v395 = vmul.f32 %v387, %v220
  %v396 = vmul.f32 %v389, %v220
  %v397 = vmul.f32 %v391, %v220
  %v398 = vadd.f32 %v380, %v395
  %v399 = vadd.f32 %v381, %v396
  %v400 = vadd.f32 %v382, %v397
  %v401 = vsub.f32 %v251, %v254
  %v402 = vsub.f32 %v252, %v255
  %v403 = vsub.f32 %v253, %v256
  %v404 = vmul.f32 %v401, 1.442695
  %v405 = vpow.pop %v404
  %v406 = vmul.f32 %v402, 1.442695
  %v407 = vpow.pop %v406
  %v408 = vmul.f32 %v403, 1.442695
  %v409 = vpow.pop %v408
  %v410 = vadd.f32 %v392, %v405
  %v411 = vadd.f32 %v393, %v407
  %v412 = vadd.f32 %v394, %v409
  %v413 = vmul.f32 %v405, %v240
  %v414 = vmul.f32 %v407, %v240
  %v415 = vmul.f32 %v409, %v240
  %v416 = vadd.f32 %v398, %v413
  %v417 = vadd.f32 %v399, %v414
  %v418 = vadd.f32 %v400, %v415
  %v419 = vld [vmem:[%s3] sm:$0xff]
  %v420 = vld [vmem:[%s3 + $0x8] sm:$0xff]
  %v421 = vld [vmem:[%s3 + $0x10] sm:$0xf]
  %v422 = vmul.f32 %v419, %v416
  %v423 = vmul.f32 %v420, %v417
  %v424 = vmul.f32 %v421, %v418
  %v425 = vrcp.pop %v410
  %v426 = vrcp.pop %v411
  %v427 = vrcp.pop %v412
  %v428 = vmul.f32 %v422, %v425
  %v429 = vmul.f32 %v423, %v426
  %v430 = vmul.f32 %v424, %v427
  %v431 = vmax.f32 %v428, 0.0
  %v432 = vmax.f32 %v429, 0.0
  %v433 = vmax.f32 %v430, 0.0
  %v434 = vlaneseq
  %vm435 = vcmp.ge.s32.totalorder %v434, 0
  %vm436 = vcmp.lt.s32.totalorder %v434, 128
  %vm437 = vmand %vm435, %vm436
  %438 = vst.msk [vmem:[#allocation2] sm:$0x1] %vm437, %v431
  %v441 = vunpack.c.l.s4 1966171168
  %v442 = vunpack.c.0.s8 %v441
  %v443 = vlaneseq
  %v444 = vshrl.u32 %v443, 7
  %v445 = vsub.s32 %v442, %v444
  %v446 = vrot.slane %v431, %v445
  %v447 = vcombine.high %v446, %v446
  %v449 = vunpack.c.l.s4 1966171168
  %v450 = vunpack.c.0.s8 %v449
  %v451 = vlaneseq
  %v452 = vshrl.u32 %v451, 7
  %v453 = vsub.s32 %v450, %v452
  %v454 = vrot.slane %v446, %v453
  %v456 = vunpack.c.l.s4 1966171168
  %v457 = vunpack.c.0.s8 %v456
  %v458 = vlaneseq
  %v459 = vshrl.u32 %v458, 7
  %v460 = vsub.s32 %v457, %v459
  %v461 = vrot.slane %v447, %v460
  %463 = vst.msk [vmem:[#allocation2 + $0x1] sm:$0x1] %vm437, %v461
  %v464 = vcombine.high %v454, %v454
  %466 = vst.msk [vmem:[#allocation2 + $0x2] sm:$0x1] %vm437, %v464
  %v467 = vcombine.high %v461, %v461
  %469 = vst.msk [vmem:[#allocation2 + $0x3] sm:$0x1] %vm437, %v467
  %v470 = vcombine.high %v431, %v431
  %v472 = vunpack.c.l.s4 1966171168
  %v473 = vunpack.c.0.s8 %v472
  %v474 = vlaneseq
  %v475 = vshrl.u32 %v474, 7
  %v476 = vsub.s32 %v473, %v475
  %v477 = vrot.slane %v470, %v476
  %v479 = vunpack.c.l.s4 1966171168
  %v480 = vunpack.c.0.s8 %v479
  %v481 = vlaneseq
  %v482 = vshrl.u32 %v481, 7
  %v483 = vsub.s32 %v480, %v482
  %v484 = vrot.slane %v477, %v483
  %486 = vst.msk [vmem:[#allocation2 + $0x4] sm:$0x1] %vm437, %v484
  %v487 = vcombine.high %v477, %v477
  %v489 = vunpack.c.l.s4 1966171168
  %v490 = vunpack.c.0.s8 %v489
  %v491 = vlaneseq
  %v492 = vshrl.u32 %v491, 7
  %v493 = vsub.s32 %v490, %v492
  %v494 = vrot.slane %v487, %v493
  %496 = vst.msk [vmem:[#allocation2 + $0x5] sm:$0x1] %vm437, %v494
  %v497 = vcombine.high %v484, %v484
  %499 = vst.msk [vmem:[#allocation2 + $0x6] sm:$0x1] %vm437, %v497
  %v500 = vcombine.high %v494, %v494
  %502 = vst.msk [vmem:[#allocation2 + $0x7] sm:$0x1] %vm437, %v500
  %503 = vst.msk [vmem:[#allocation2 + $0x8] sm:$0x1] %vm437, %v432
  %v506 = vunpack.c.l.s4 1966171168
  %v507 = vunpack.c.0.s8 %v506
  %v508 = vlaneseq
  %v509 = vshrl.u32 %v508, 7
  %v510 = vsub.s32 %v507, %v509
  %v511 = vrot.slane %v432, %v510
  %v512 = vcombine.high %v511, %v511
  %v514 = vunpack.c.l.s4 1966171168
  %v515 = vunpack.c.0.s8 %v514
  %v516 = vlaneseq
  %v517 = vshrl.u32 %v516, 7
  %v518 = vsub.s32 %v515, %v517
  %v519 = vrot.slane %v511, %v518
  %v521 = vunpack.c.l.s4 1966171168
  %v522 = vunpack.c.0.s8 %v521
  %v523 = vlaneseq
  %v524 = vshrl.u32 %v523, 7
  %v525 = vsub.s32 %v522, %v524
  %v526 = vrot.slane %v512, %v525
  %528 = vst.msk [vmem:[#allocation2 + $0x9] sm:$0x1] %vm437, %v526
  %v529 = vcombine.high %v519, %v519
  %531 = vst.msk [vmem:[#allocation2 + $0xa] sm:$0x1] %vm437, %v529
  %v532 = vcombine.high %v526, %v526
  %534 = vst.msk [vmem:[#allocation2 + $0xb] sm:$0x1] %vm437, %v532
  %v535 = vcombine.high %v432, %v432
  %v537 = vunpack.c.l.s4 1966171168
  %v538 = vunpack.c.0.s8 %v537
  %v539 = vlaneseq
  %v540 = vshrl.u32 %v539, 7
  %v541 = vsub.s32 %v538, %v540
  %v542 = vrot.slane %v535, %v541
  %v544 = vunpack.c.l.s4 1966171168
  %v545 = vunpack.c.0.s8 %v544
  %v546 = vlaneseq
  %v547 = vshrl.u32 %v546, 7
  %v548 = vsub.s32 %v545, %v547
  %v549 = vrot.slane %v542, %v548
  %551 = vst.msk [vmem:[#allocation2 + $0xc] sm:$0x1] %vm437, %v549
  %v552 = vcombine.high %v542, %v542
  %v554 = vunpack.c.l.s4 1966171168
  %v555 = vunpack.c.0.s8 %v554
  %v556 = vlaneseq
  %v557 = vshrl.u32 %v556, 7
  %v558 = vsub.s32 %v555, %v557
  %v559 = vrot.slane %v552, %v558
  %561 = vst.msk [vmem:[#allocation2 + $0xd] sm:$0x1] %vm437, %v559
  %v562 = vcombine.high %v549, %v549
  %564 = vst.msk [vmem:[#allocation2 + $0xe] sm:$0x1] %vm437, %v562
  %v565 = vcombine.high %v559, %v559
  %567 = vst.msk [vmem:[#allocation2 + $0xf] sm:$0x1] %vm437, %v565
  %568 = vst.msk [vmem:[#allocation2 + $0x10] sm:$0x1] %vm437, %v433
  %v571 = vunpack.c.l.s4 1966171168
  %v572 = vunpack.c.0.s8 %v571
  %v573 = vlaneseq
  %v574 = vshrl.u32 %v573, 7
  %v575 = vsub.s32 %v572, %v574
  %v576 = vrot.slane %v433, %v575
  %v577 = vcombine.high %v576, %v576
  %v579 = vunpack.c.l.s4 1966171168
  %v580 = vunpack.c.0.s8 %v579
  %v581 = vlaneseq
  %v582 = vshrl.u32 %v581, 7
  %v583 = vsub.s32 %v580, %v582
  %v584 = vrot.slane %v576, %v583
  %v586 = vunpack.c.l.s4 1966171168
  %v587 = vunpack.c.0.s8 %v586
  %v588 = vlaneseq
  %v589 = vshrl.u32 %v588, 7
  %v590 = vsub.s32 %v587, %v589
  %v591 = vrot.slane %v577, %v590
  %593 = vst.msk [vmem:[#allocation2 + $0x11] sm:$0x1] %vm437, %v591
  %v594 = vcombine.high %v584, %v584
  %596 = vst.msk [vmem:[#allocation2 + $0x12] sm:$0x1] %vm437, %v594
  %v597 = vcombine.high %v591, %v591
  %599 = vst.msk [vmem:[#allocation2 + $0x13] sm:$0x1] %vm437, %v597
  %v600 = vld [vmem:[%s6] sm:$0xff]
  %v601 = vld [vmem:[%s6 + $0x8] sm:$0xff]
  %v602 = vld [vmem:[%s6 + $0x10] sm:$0xff]
  %v603 = vld [vmem:[%s6 + $0x18] sm:$0xff]
  %v604 = vld [vmem:[%s6 + $0x20] sm:$0xff]
  %v605 = vld [vmem:[%s6 + $0x28] sm:$0xff]
  %v606 = vld [vmem:[%s6 + $0x30] sm:$0xff]
  %v607 = vld [vmem:[%s6 + $0x38] sm:$0xff]
  %v608 = vld [vmem:[%s6 + $0x40] sm:$0xff]
  %v609 = vld [vmem:[%s6 + $0x48] sm:$0xff]
  %v610 = vld [vmem:[%s6 + $0x50] sm:$0xff]
  %v611 = vld [vmem:[%s6 + $0x58] sm:$0xff]
  %v612 = vld [vmem:[%s6 + $0x60] sm:$0xff]
  %v613 = vld [vmem:[%s6 + $0x68] sm:$0xff]
  %v614 = vld [vmem:[%s6 + $0x70] sm:$0xff]
  %v615 = vld [vmem:[%s6 + $0x78] sm:$0xff]
  %v616 = vld [vmem:[%s6 + $0x80] sm:$0xff]
  %v617 = vld [vmem:[%s6 + $0x88] sm:$0xff]
  %v618 = vld [vmem:[%s6 + $0x90] sm:$0xff]
  %v619 = vld [vmem:[%s6 + $0x98] sm:$0xff]
  %v620 = vld [vmem:[%s6 + $0xa0] sm:$0xff]
  %v621 = vld [vmem:[%s6 + $0xa8] sm:$0xff]
  %v622 = vld [vmem:[%s6 + $0xb0] sm:$0xff]
  %v623 = vld [vmem:[%s6 + $0xb8] sm:$0xff]
  %v624 = vld [vmem:[%s6 + $0xc0] sm:$0xff]
  %v625 = vld [vmem:[%s6 + $0xc8] sm:$0xff]
  %v626 = vld [vmem:[%s6 + $0xd0] sm:$0xff]
  %v627 = vld [vmem:[%s6 + $0xd8] sm:$0xff]
  %v628 = vld [vmem:[%s6 + $0xe0] sm:$0xff]
  %v629 = vld [vmem:[%s6 + $0xe8] sm:$0xff]
  %v630 = vld [vmem:[%s6 + $0xf0] sm:$0xff]
  %v631 = vld [vmem:[%s6 + $0xf8] sm:$0xff]
  %v632 = vld [vmem:[%s6 + $0x100] sm:$0xff]
  %v633 = vld [vmem:[%s6 + $0x108] sm:$0xff]
  %v634 = vld [vmem:[%s6 + $0x110] sm:$0xff]
  %v635 = vld [vmem:[%s6 + $0x118] sm:$0xff]
  %v636 = vld [vmem:[%s6 + $0x120] sm:$0xff]
  %v637 = vld [vmem:[%s6 + $0x128] sm:$0xff]
  %v638 = vld [vmem:[%s6 + $0x130] sm:$0xff]
  %v639 = vld [vmem:[%s6 + $0x138] sm:$0xff]
  %v640 = vld [vmem:[%s7] sm:$0x1]
  %v641 = vld [vmem:[#allocation2] sm:$0x7]
  %v643 = vlaneseq
  %v644 = vshrl.u32 %v643, 7
  %v645 = vsub.s32 0, %v644
  %v646 = vrot.slane %v641, %v645
  %v647 = vlaneseq
  %v648 = vshrl.u32 %v647, 7
  %v649 = vsub.s32 1, %v648
  %v650 = vrot.slane %v641, %v649
  %v651 = vlaneseq
  %v652 = vshrl.u32 %v651, 7
  %v653 = vsub.s32 2, %v652
  %v654 = vrot.slane %v641, %v653
  %vm657 = vcmask 523264
  %v658 = vsel %vm657, %v654, 0
  %660 = vmatprep.subr.mxu0 0.0
  %661 = vmatpush1.msra.mxu0 %v615
  %662 = vmatprep.subr.mxu0 0.0
  %663 = vmatpush1.msra.mxu0 %v614
  %664 = vmatprep.subr.mxu0 0.0
  %665 = vmatpush1.msra.mxu0 %v613
  %666 = vmatprep.subr.mxu0 0.0
  %667 = vmatpush1.msra.mxu0 %v612
  %668 = vmatprep.subr.mxu0 0.0
  %669 = vmatpush1.msra.mxu0 %v611
  %670 = vmatprep.subr.mxu0 0.0
  %671 = vmatpush1.msra.mxu0 %v610
  %672 = vmatprep.subr.mxu0 0.0
  %673 = vmatpush1.msra.mxu0 %v609
  %674 = vmatprep.subr.mxu0 0.0
  %675 = vmatpush1.msra.mxu0 %v608
  %676 = vmatprep.subr.mxu0 0.0
  %677 = vmatpush1.msra.mxu0 %v607
  %678 = vmatprep.subr.mxu0 0.0
  %679 = vmatpush1.msra.mxu0 %v606
  %680 = vmatprep.subr.mxu0 0.0
  %681 = vmatpush1.msra.mxu0 %v605
  %682 = vmatprep.subr.mxu0 0.0
  %683 = vmatpush1.msra.mxu0 %v604
  %684 = vmatprep.subr.mxu0 0.0
  %685 = vmatpush1.msra.mxu0 %v603
  %686 = vmatprep.subr.mxu0 0.0
  %687 = vmatpush1.msra.mxu0 %v602
  %688 = vmatprep.subr.mxu0 0.0
  %689 = vmatpush1.msra.mxu0 %v601
  %690 = vmatprep.subr.mxu0 0.0
  %691 = vmatpush1.msra.mxu0 %v600
  %692 = vmatprep.subr.mxu0 0.0
  %693 = vmatpush2.msra.mxu0 %v631
  %694 = vmatprep.subr.mxu0 0.0
  %695 = vmatpush2.msra.mxu0 %v630
  %696 = vmatprep.subr.mxu0 0.0
  %697 = vmatpush2.msra.mxu0 %v629
  %698 = vmatprep.subr.mxu0 0.0
  %699 = vmatpush2.msra.mxu0 %v628
  %700 = vmatprep.subr.mxu0 0.0
  %701 = vmatpush2.msra.mxu0 %v627
  %702 = vmatprep.subr.mxu0 0.0
  %703 = vmatpush2.msra.mxu0 %v626
  %704 = vmatprep.subr.mxu0 0.0
  %705 = vmatpush2.msra.mxu0 %v625
  %706 = vmatprep.subr.mxu0 0.0
  %707 = vmatpush2.msra.mxu0 %v624
  %708 = vmatprep.subr.mxu0 0.0
  %709 = vmatpush2.msra.mxu0 %v623
  %710 = vmatprep.subr.mxu0 0.0
  %711 = vmatpush2.msra.mxu0 %v622
  %712 = vmatprep.subr.mxu0 0.0
  %713 = vmatpush2.msra.mxu0 %v621
  %714 = vmatprep.subr.mxu0 0.0
  %715 = vmatpush2.msra.mxu0 %v620
  %716 = vmatprep.subr.mxu0 0.0
  %717 = vmatpush2.msra.mxu0 %v619
  %718 = vmatprep.subr.mxu0 0.0
  %719 = vmatpush2.msra.mxu0 %v618
  %720 = vmatprep.subr.mxu0 0.0
  %721 = vmatpush2.msra.mxu0 %v617
  %722 = vmatprep.subr.mxu0 0.0
  %723 = vmatpush2.msra.mxu0 %v616
  %724 = vmatprep.mubr.f32.mxu0 %v650
  %725 = vmatmul.mubr.f32.gmra.mxu0 %v646
  %v726 = vpop.f32.mrf.mxu0
  %v727 = vadd.f32 %v640, %v726
  %v728 = vpop.f32.mrf.mxu0
  %729 = vdwg.mxu0
  %730 = vmatprep.subr.mxu0 0.0
  %731 = vmatpush1.msra.mxu0 0.0
  %732 = vmatprep.subr.mxu0 0.0
  %733 = vmatpush1.msra.mxu0 0.0
  %734 = vmatprep.subr.mxu0 0.0
  %735 = vmatpush1.msra.mxu0 0.0
  %736 = vmatprep.subr.mxu0 0.0
  %737 = vmatpush1.msra.mxu0 0.0
  %738 = vmatprep.subr.mxu0 0.0
  %739 = vmatpush1.msra.mxu0 0.0
  %740 = vmatprep.subr.mxu0 0.0
  %741 = vmatpush1.msra.mxu0 0.0
  %742 = vmatprep.subr.mxu0 0.0
  %743 = vmatpush1.msra.mxu0 0.0
  %744 = vmatprep.subr.mxu0 0.0
  %745 = vmatpush1.msra.mxu0 0.0
  %746 = vmatprep.subr.mxu0 0.0
  %747 = vmatpush1.msra.mxu0 %v639
  %748 = vmatprep.subr.mxu0 0.0
  %749 = vmatpush1.msra.mxu0 %v638
  %750 = vmatprep.subr.mxu0 0.0
  %751 = vmatpush1.msra.mxu0 %v637
  %752 = vmatprep.subr.mxu0 0.0
  %753 = vmatpush1.msra.mxu0 %v636
  %754 = vmatprep.subr.mxu0 0.0
  %755 = vmatpush1.msra.mxu0 %v635
  %756 = vmatprep.subr.mxu0 0.0
  %757 = vmatpush1.msra.mxu0 %v634
  %758 = vmatprep.subr.mxu0 0.0
  %759 = vmatpush1.msra.mxu0 %v633
  %760 = vmatprep.subr.mxu0 0.0
  %761 = vmatpush1.msra.mxu0 %v632
  %762 = vmatprep.subr.mxu0 0.0
  %763 = vmatpush2.msra.mxu0 0.0
  %764 = vmatprep.subr.mxu0 0.0
  %765 = vmatpush2.msra.mxu0 0.0
  %766 = vmatprep.subr.mxu0 0.0
  %767 = vmatpush2.msra.mxu0 0.0
  %768 = vmatprep.subr.mxu0 0.0
  %769 = vmatpush2.msra.mxu0 0.0
  %770 = vmatprep.subr.mxu0 0.0
  %771 = vmatpush2.msra.mxu0 0.0
  %772 = vmatprep.subr.mxu0 0.0
  %773 = vmatpush2.msra.mxu0 0.0
  %774 = vmatprep.subr.mxu0 0.0
  %775 = vmatpush2.msra.mxu0 0.0
  %776 = vmatprep.subr.mxu0 0.0
  %777 = vmatpush2.msra.mxu0 0.0
  %778 = vmatprep.subr.mxu0 0.0
  %779 = vmatpush2.msra.mxu0 0.0
  %780 = vmatprep.subr.mxu0 0.0
  %781 = vmatpush2.msra.mxu0 0.0
  %782 = vmatprep.subr.mxu0 0.0
  %783 = vmatpush2.msra.mxu0 0.0
  %784 = vmatprep.subr.mxu0 0.0
  %785 = vmatpush2.msra.mxu0 0.0
  %786 = vmatprep.subr.mxu0 0.0
  %787 = vmatpush2.msra.mxu0 0.0
  %788 = vmatprep.subr.mxu0 0.0
  %789 = vmatpush2.msra.mxu0 0.0
  %790 = vmatprep.subr.mxu0 0.0
  %791 = vmatpush2.msra.mxu0 0.0
  %792 = vmatprep.subr.mxu0 0.0
  %793 = vmatpush2.msra.mxu0 0.0
  %794 = vmatprep.mubr.f32.mxu0 0.0
  %795 = vmatmul.mubr.f32.gmra.mxu0 %v658
  %v796 = vpop.f32.mrf.mxu0
  %v797 = vadd.f32 %v727, %v796
  %v798 = vpop.f32.mrf.mxu0
  %799 = vdwg.mxu0
  %800 = vst [vmem:[%s8] sm:$0x1] %v797
  %v801 = vld [vmem:[#allocation2 + $0x2] sm:$0x7]
  %v803 = vlaneseq
  %v804 = vshrl.u32 %v803, 7
  %v805 = vsub.s32 0, %v804
  %v806 = vrot.slane %v801, %v805
  %v807 = vlaneseq
  %v808 = vshrl.u32 %v807, 7
  %v809 = vsub.s32 1, %v808
  %v810 = vrot.slane %v801, %v809
  %v811 = vlaneseq
  %v812 = vshrl.u32 %v811, 7
  %v813 = vsub.s32 2, %v812
  %v814 = vrot.slane %v801, %v813
  %815 = vrot.lane.b32.xlu0 %v806, 64
  %v816 = vpop.permute.xlu0 %815
  %817 = vrot.lane.b32.xlu0 %v810, 64
  %v818 = vpop.permute.xlu0 %817
  %819 = vrot.lane.b32.xlu0 %v814, 64
  %v820 = vpop.permute.xlu0 %819
  %v821 = vsel %vm657, %v816, %v818
  %v822 = vsel %vm657, %v818, %v820
  %v825 = vsel %vm657, %v820, 0
  %827 = vmatprep.subr.mxu0 0.0
  %828 = vmatpush1.msra.mxu0 %v615
  %829 = vmatprep.subr.mxu0 0.0
  %830 = vmatpush1.msra.mxu0 %v614
  %831 = vmatprep.subr.mxu0 0.0
  %832 = vmatpush1.msra.mxu0 %v613
  %833 = vmatprep.subr.mxu0 0.0
  %834 = vmatpush1.msra.mxu0 %v612
  %835 = vmatprep.subr.mxu0 0.0
  %836 = vmatpush1.msra.mxu0 %v611
  %837 = vmatprep.subr.mxu0 0.0
  %838 = vmatpush1.msra.mxu0 %v610
  %839 = vmatprep.subr.mxu0 0.0
  %840 = vmatpush1.msra.mxu0 %v609
  %841 = vmatprep.subr.mxu0 0.0
  %842 = vmatpush1.msra.mxu0 %v608
  %843 = vmatprep.subr.mxu0 0.0
  %844 = vmatpush1.msra.mxu0 %v607
  %845 = vmatprep.subr.mxu0 0.0
  %846 = vmatpush1.msra.mxu0 %v606
  %847 = vmatprep.subr.mxu0 0.0
  %848 = vmatpush1.msra.mxu0 %v605
  %849 = vmatprep.subr.mxu0 0.0
  %850 = vmatpush1.msra.mxu0 %v604
  %851 = vmatprep.subr.mxu0 0.0
  %852 = vmatpush1.msra.mxu0 %v603
  %853 = vmatprep.subr.mxu0 0.0
  %854 = vmatpush1.msra.mxu0 %v602
  %855 = vmatprep.subr.mxu0 0.0
  %856 = vmatpush1.msra.mxu0 %v601
  %857 = vmatprep.subr.mxu0 0.0
  %858 = vmatpush1.msra.mxu0 %v600
  %859 = vmatprep.subr.mxu0 0.0
  %860 = vmatpush2.msra.mxu0 %v631
  %861 = vmatprep.subr.mxu0 0.0
  %862 = vmatpush2.msra.mxu0 %v630
  %863 = vmatprep.subr.mxu0 0.0
  %864 = vmatpush2.msra.mxu0 %v629
  %865 = vmatprep.subr.mxu0 0.0
  %866 = vmatpush2.msra.mxu0 %v628
  %867 = vmatprep.subr.mxu0 0.0
  %868 = vmatpush2.msra.mxu0 %v627
  %869 = vmatprep.subr.mxu0 0.0
  %870 = vmatpush2.msra.mxu0 %v626
  %871 = vmatprep.subr.mxu0 0.0
  %872 = vmatpush2.msra.mxu0 %v625
  %873 = vmatprep.subr.mxu0 0.0
  %874 = vmatpush2.msra.mxu0 %v624
  %875 = vmatprep.subr.mxu0 0.0
  %876 = vmatpush2.msra.mxu0 %v623
  %877 = vmatprep.subr.mxu0 0.0
  %878 = vmatpush2.msra.mxu0 %v622
  %879 = vmatprep.subr.mxu0 0.0
  %880 = vmatpush2.msra.mxu0 %v621
  %881 = vmatprep.subr.mxu0 0.0
  %882 = vmatpush2.msra.mxu0 %v620
  %883 = vmatprep.subr.mxu0 0.0
  %884 = vmatpush2.msra.mxu0 %v619
  %885 = vmatprep.subr.mxu0 0.0
  %886 = vmatpush2.msra.mxu0 %v618
  %887 = vmatprep.subr.mxu0 0.0
  %888 = vmatpush2.msra.mxu0 %v617
  %889 = vmatprep.subr.mxu0 0.0
  %890 = vmatpush2.msra.mxu0 %v616
  %891 = vmatprep.mubr.f32.mxu0 %v822
  %892 = vmatmul.mubr.f32.gmra.mxu0 %v821
  %v893 = vpop.f32.mrf.mxu0
  %v894 = vadd.f32 %v640, %v893
  %v895 = vpop.f32.mrf.mxu0
  %896 = vdwg.mxu0
  %897 = vmatprep.subr.mxu0 0.0
  %898 = vmatpush1.msra.mxu0 0.0
  %899 = vmatprep.subr.mxu0 0.0
  %900 = vmatpush1.msra.mxu0 0.0
  %901 = vmatprep.subr.mxu0 0.0
  %902 = vmatpush1.msra.mxu0 0.0
  %903 = vmatprep.subr.mxu0 0.0
  %904 = vmatpush1.msra.mxu0 0.0
  %905 = vmatprep.subr.mxu0 0.0
  %906 = vmatpush1.msra.mxu0 0.0
  %907 = vmatprep.subr.mxu0 0.0
  %908 = vmatpush1.msra.mxu0 0.0
  %909 = vmatprep.subr.mxu0 0.0
  %910 = vmatpush1.msra.mxu0 0.0
  %911 = vmatprep.subr.mxu0 0.0
  %912 = vmatpush1.msra.mxu0 0.0
  %913 = vmatprep.subr.mxu0 0.0
  %914 = vmatpush1.msra.mxu0 %v639
  %915 = vmatprep.subr.mxu0 0.0
  %916 = vmatpush1.msra.mxu0 %v638
  %917 = vmatprep.subr.mxu0 0.0
  %918 = vmatpush1.msra.mxu0 %v637
  %919 = vmatprep.subr.mxu0 0.0
  %920 = vmatpush1.msra.mxu0 %v636
  %921 = vmatprep.subr.mxu0 0.0
  %922 = vmatpush1.msra.mxu0 %v635
  %923 = vmatprep.subr.mxu0 0.0
  %924 = vmatpush1.msra.mxu0 %v634
  %925 = vmatprep.subr.mxu0 0.0
  %926 = vmatpush1.msra.mxu0 %v633
  %927 = vmatprep.subr.mxu0 0.0
  %928 = vmatpush1.msra.mxu0 %v632
  %929 = vmatprep.subr.mxu0 0.0
  %930 = vmatpush2.msra.mxu0 0.0
  %931 = vmatprep.subr.mxu0 0.0
  %932 = vmatpush2.msra.mxu0 0.0
  %933 = vmatprep.subr.mxu0 0.0
  %934 = vmatpush2.msra.mxu0 0.0
  %935 = vmatprep.subr.mxu0 0.0
  %936 = vmatpush2.msra.mxu0 0.0
  %937 = vmatprep.subr.mxu0 0.0
  %938 = vmatpush2.msra.mxu0 0.0
  %939 = vmatprep.subr.mxu0 0.0
  %940 = vmatpush2.msra.mxu0 0.0
  %941 = vmatprep.subr.mxu0 0.0
  %942 = vmatpush2.msra.mxu0 0.0
  %943 = vmatprep.subr.mxu0 0.0
  %944 = vmatpush2.msra.mxu0 0.0
  %945 = vmatprep.subr.mxu0 0.0
  %946 = vmatpush2.msra.mxu0 0.0
  %947 = vmatprep.subr.mxu0 0.0
  %948 = vmatpush2.msra.mxu0 0.0
  %949 = vmatprep.subr.mxu0 0.0
  %950 = vmatpush2.msra.mxu0 0.0
  %951 = vmatprep.subr.mxu0 0.0
  %952 = vmatpush2.msra.mxu0 0.0
  %953 = vmatprep.subr.mxu0 0.0
  %954 = vmatpush2.msra.mxu0 0.0
  %955 = vmatprep.subr.mxu0 0.0
  %956 = vmatpush2.msra.mxu0 0.0
  %957 = vmatprep.subr.mxu0 0.0
  %958 = vmatpush2.msra.mxu0 0.0
  %959 = vmatprep.subr.mxu0 0.0
  %960 = vmatpush2.msra.mxu0 0.0
  %961 = vmatprep.mubr.f32.mxu0 0.0
  %962 = vmatmul.mubr.f32.gmra.mxu0 %v825
  %v963 = vpop.f32.mrf.mxu0
  %v964 = vadd.f32 %v894, %v963
  %v965 = vpop.f32.mrf.mxu0
  %966 = vdwg.mxu0
  %967 = vst [vmem:[%s8 + $0x1] sm:$0x1] %v964
  %v968 = vld [vmem:[#allocation2 + $0x5] sm:$0x7]
  %v970 = vlaneseq
  %v971 = vshrl.u32 %v970, 7
  %v972 = vsub.s32 0, %v971
  %v973 = vrot.slane %v968, %v972
  %v974 = vlaneseq
  %v975 = vshrl.u32 %v974, 7
  %v976 = vsub.s32 1, %v975
  %v977 = vrot.slane %v968, %v976
  %v978 = vlaneseq
  %v979 = vshrl.u32 %v978, 7
  %v980 = vsub.s32 2, %v979
  %v981 = vrot.slane %v968, %v980
  %v984 = vsel %vm657, %v981, 0
  %986 = vmatprep.subr.mxu0 0.0
  %987 = vmatpush1.msra.mxu0 %v615
  %988 = vmatprep.subr.mxu0 0.0
  %989 = vmatpush1.msra.mxu0 %v614
  %990 = vmatprep.subr.mxu0 0.0
  %991 = vmatpush1.msra.mxu0 %v613
  %992 = vmatprep.subr.mxu0 0.0
  %993 = vmatpush1.msra.mxu0 %v612
  %994 = vmatprep.subr.mxu0 0.0
  %995 = vmatpush1.msra.mxu0 %v611
  %996 = vmatprep.subr.mxu0 0.0
  %997 = vmatpush1.msra.mxu0 %v610
  %998 = vmatprep.subr.mxu0 0.0
  %999 = vmatpush1.msra.mxu0 %v609
  %1000 = vmatprep.subr.mxu0 0.0
  %1001 = vmatpush1.msra.mxu0 %v608
  %1002 = vmatprep.subr.mxu0 0.0
  %1003 = vmatpush1.msra.mxu0 %v607
  %1004 = vmatprep.subr.mxu0 0.0
  %1005 = vmatpush1.msra.mxu0 %v606
  %1006 = vmatprep.subr.mxu0 0.0
  %1007 = vmatpush1.msra.mxu0 %v605
  %1008 = vmatprep.subr.mxu0 0.0
  %1009 = vmatpush1.msra.mxu0 %v604
  %1010 = vmatprep.subr.mxu0 0.0
  %1011 = vmatpush1.msra.mxu0 %v603
  %1012 = vmatprep.subr.mxu0 0.0
  %1013 = vmatpush1.msra.mxu0 %v602
  %1014 = vmatprep.subr.mxu0 0.0
  %1015 = vmatpush1.msra.mxu0 %v601
  %1016 = vmatprep.subr.mxu0 0.0
  %1017 = vmatpush1.msra.mxu0 %v600
  %1018 = vmatprep.subr.mxu0 0.0
  %1019 = vmatpush2.msra.mxu0 %v631
  %1020 = vmatprep.subr.mxu0 0.0
  %1021 = vmatpush2.msra.mxu0 %v630
  %1022 = vmatprep.subr.mxu0 0.0
  %1023 = vmatpush2.msra.mxu0 %v629
  %1024 = vmatprep.subr.mxu0 0.0
  %1025 = vmatpush2.msra.mxu0 %v628
  %1026 = vmatprep.subr.mxu0 0.0
  %1027 = vmatpush2.msra.mxu0 %v627
  %1028 = vmatprep.subr.mxu0 0.0
  %1029 = vmatpush2.msra.mxu0 %v626
  %1030 = vmatprep.subr.mxu0 0.0
  %1031 = vmatpush2.msra.mxu0 %v625
  %1032 = vmatprep.subr.mxu0 0.0
  %1033 = vmatpush2.msra.mxu0 %v624
  %1034 = vmatprep.subr.mxu0 0.0
  %1035 = vmatpush2.msra.mxu0 %v623
  %1036 = vmatprep.subr.mxu0 0.0
  %1037 = vmatpush2.msra.mxu0 %v622
  %1038 = vmatprep.subr.mxu0 0.0
  %1039 = vmatpush2.msra.mxu0 %v621
  %1040 = vmatprep.subr.mxu0 0.0
  %1041 = vmatpush2.msra.mxu0 %v620
  %1042 = vmatprep.subr.mxu0 0.0
  %1043 = vmatpush2.msra.mxu0 %v619
  %1044 = vmatprep.subr.mxu0 0.0
  %1045 = vmatpush2.msra.mxu0 %v618
  %1046 = vmatprep.subr.mxu0 0.0
  %1047 = vmatpush2.msra.mxu0 %v617
  %1048 = vmatprep.subr.mxu0 0.0
  %1049 = vmatpush2.msra.mxu0 %v616
  %1050 = vmatprep.mubr.f32.mxu0 %v977
  %1051 = vmatmul.mubr.f32.gmra.mxu0 %v973
  %v1052 = vpop.f32.mrf.mxu0
  %v1053 = vadd.f32 %v640, %v1052
  %v1054 = vpop.f32.mrf.mxu0
  %1055 = vdwg.mxu0
  %1056 = vmatprep.subr.mxu0 0.0
  %1057 = vmatpush1.msra.mxu0 0.0
  %1058 = vmatprep.subr.mxu0 0.0
  %1059 = vmatpush1.msra.mxu0 0.0
  %1060 = vmatprep.subr.mxu0 0.0
  %1061 = vmatpush1.msra.mxu0 0.0
  %1062 = vmatprep.subr.mxu0 0.0
  %1063 = vmatpush1.msra.mxu0 0.0
  %1064 = vmatprep.subr.mxu0 0.0
  %1065 = vmatpush1.msra.mxu0 0.0
  %1066 = vmatprep.subr.mxu0 0.0
  %1067 = vmatpush1.msra.mxu0 0.0
  %1068 = vmatprep.subr.mxu0 0.0
  %1069 = vmatpush1.msra.mxu0 0.0
  %1070 = vmatprep.subr.mxu0 0.0
  %1071 = vmatpush1.msra.mxu0 0.0
  %1072 = vmatprep.subr.mxu0 0.0
  %1073 = vmatpush1.msra.mxu0 %v639
  %1074 = vmatprep.subr.mxu0 0.0
  %1075 = vmatpush1.msra.mxu0 %v638
  %1076 = vmatprep.subr.mxu0 0.0
  %1077 = vmatpush1.msra.mxu0 %v637
  %1078 = vmatprep.subr.mxu0 0.0
  %1079 = vmatpush1.msra.mxu0 %v636
  %1080 = vmatprep.subr.mxu0 0.0
  %1081 = vmatpush1.msra.mxu0 %v635
  %1082 = vmatprep.subr.mxu0 0.0
  %1083 = vmatpush1.msra.mxu0 %v634
  %1084 = vmatprep.subr.mxu0 0.0
  %1085 = vmatpush1.msra.mxu0 %v633
  %1086 = vmatprep.subr.mxu0 0.0
  %1087 = vmatpush1.msra.mxu0 %v632
  %1088 = vmatprep.subr.mxu0 0.0
  %1089 = vmatpush2.msra.mxu0 0.0
  %1090 = vmatprep.subr.mxu0 0.0
  %1091 = vmatpush2.msra.mxu0 0.0
  %1092 = vmatprep.subr.mxu0 0.0
  %1093 = vmatpush2.msra.mxu0 0.0
  %1094 = vmatprep.subr.mxu0 0.0
  %1095 = vmatpush2.msra.mxu0 0.0
  %1096 = vmatprep.subr.mxu0 0.0
  %1097 = vmatpush2.msra.mxu0 0.0
  %1098 = vmatprep.subr.mxu0 0.0
  %1099 = vmatpush2.msra.mxu0 0.0
  %1100 = vmatprep.subr.mxu0 0.0
  %1101 = vmatpush2.msra.mxu0 0.0
  %1102 = vmatprep.subr.mxu0 0.0
  %1103 = vmatpush2.msra.mxu0 0.0
  %1104 = vmatprep.subr.mxu0 0.0
  %1105 = vmatpush2.msra.mxu0 0.0
  %1106 = vmatprep.subr.mxu0 0.0
  %1107 = vmatpush2.msra.mxu0 0.0
  %1108 = vmatprep.subr.mxu0 0.0
  %1109 = vmatpush2.msra.mxu0 0.0
  %1110 = vmatprep.subr.mxu0 0.0
  %1111 = vmatpush2.msra.mxu0 0.0
  %1112 = vmatprep.subr.mxu0 0.0
  %1113 = vmatpush2.msra.mxu0 0.0
  %1114 = vmatprep.subr.mxu0 0.0
  %1115 = vmatpush2.msra.mxu0 0.0
  %1116 = vmatprep.subr.mxu0 0.0
  %1117 = vmatpush2.msra.mxu0 0.0
  %1118 = vmatprep.subr.mxu0 0.0
  %1119 = vmatpush2.msra.mxu0 0.0
  %1120 = vmatprep.mubr.f32.mxu0 0.0
  %1121 = vmatmul.mubr.f32.gmra.mxu0 %v984
  %v1122 = vpop.f32.mrf.mxu0
  %v1123 = vadd.f32 %v1053, %v1122
  %v1124 = vpop.f32.mrf.mxu0
  %1125 = vdwg.mxu0
  %1126 = vst [vmem:[%s8 + $0x2] sm:$0x1] %v1123
  %v1127 = vld [vmem:[#allocation2 + $0x7] sm:$0x7]
  %v1129 = vlaneseq
  %v1130 = vshrl.u32 %v1129, 7
  %v1131 = vsub.s32 0, %v1130
  %v1132 = vrot.slane %v1127, %v1131
  %v1133 = vlaneseq
  %v1134 = vshrl.u32 %v1133, 7
  %v1135 = vsub.s32 1, %v1134
  %v1136 = vrot.slane %v1127, %v1135
  %v1137 = vlaneseq
  %v1138 = vshrl.u32 %v1137, 7
  %v1139 = vsub.s32 2, %v1138
  %v1140 = vrot.slane %v1127, %v1139
  %1141 = vrot.lane.b32.xlu0 %v1132, 64
  %v1142 = vpop.permute.xlu0 %1141
  %1143 = vrot.lane.b32.xlu0 %v1136, 64
  %v1144 = vpop.permute.xlu0 %1143
  %1145 = vrot.lane.b32.xlu0 %v1140, 64
  %v1146 = vpop.permute.xlu0 %1145
  %v1147 = vsel %vm657, %v1142, %v1144
  %v1148 = vsel %vm657, %v1144, %v1146
  %v1151 = vsel %vm657, %v1146, 0
  %1153 = vmatprep.subr.mxu0 0.0
  %1154 = vmatpush1.msra.mxu0 %v615
  %1155 = vmatprep.subr.mxu0 0.0
  %1156 = vmatpush1.msra.mxu0 %v614
  %1157 = vmatprep.subr.mxu0 0.0
  %1158 = vmatpush1.msra.mxu0 %v613
  %1159 = vmatprep.subr.mxu0 0.0
  %1160 = vmatpush1.msra.mxu0 %v612
  %1161 = vmatprep.subr.mxu0 0.0
  %1162 = vmatpush1.msra.mxu0 %v611
  %1163 = vmatprep.subr.mxu0 0.0
  %1164 = vmatpush1.msra.mxu0 %v610
  %1165 = vmatprep.subr.mxu0 0.0
  %1166 = vmatpush1.msra.mxu0 %v609
  %1167 = vmatprep.subr.mxu0 0.0
  %1168 = vmatpush1.msra.mxu0 %v608
  %1169 = vmatprep.subr.mxu0 0.0
  %1170 = vmatpush1.msra.mxu0 %v607
  %1171 = vmatprep.subr.mxu0 0.0
  %1172 = vmatpush1.msra.mxu0 %v606
  %1173 = vmatprep.subr.mxu0 0.0
  %1174 = vmatpush1.msra.mxu0 %v605
  %1175 = vmatprep.subr.mxu0 0.0
  %1176 = vmatpush1.msra.mxu0 %v604
  %1177 = vmatprep.subr.mxu0 0.0
  %1178 = vmatpush1.msra.mxu0 %v603
  %1179 = vmatprep.subr.mxu0 0.0
  %1180 = vmatpush1.msra.mxu0 %v602
  %1181 = vmatprep.subr.mxu0 0.0
  %1182 = vmatpush1.msra.mxu0 %v601
  %1183 = vmatprep.subr.mxu0 0.0
  %1184 = vmatpush1.msra.mxu0 %v600
  %1185 = vmatprep.subr.mxu0 0.0
  %1186 = vmatpush2.msra.mxu0 %v631
  %1187 = vmatprep.subr.mxu0 0.0
  %1188 = vmatpush2.msra.mxu0 %v630
  %1189 = vmatprep.subr.mxu0 0.0
  %1190 = vmatpush2.msra.mxu0 %v629
  %1191 = vmatprep.subr.mxu0 0.0
  %1192 = vmatpush2.msra.mxu0 %v628
  %1193 = vmatprep.subr.mxu0 0.0
  %1194 = vmatpush2.msra.mxu0 %v627
  %1195 = vmatprep.subr.mxu0 0.0
  %1196 = vmatpush2.msra.mxu0 %v626
  %1197 = vmatprep.subr.mxu0 0.0
  %1198 = vmatpush2.msra.mxu0 %v625
  %1199 = vmatprep.subr.mxu0 0.0
  %1200 = vmatpush2.msra.mxu0 %v624
  %1201 = vmatprep.subr.mxu0 0.0
  %1202 = vmatpush2.msra.mxu0 %v623
  %1203 = vmatprep.subr.mxu0 0.0
  %1204 = vmatpush2.msra.mxu0 %v622
  %1205 = vmatprep.subr.mxu0 0.0
  %1206 = vmatpush2.msra.mxu0 %v621
  %1207 = vmatprep.subr.mxu0 0.0
  %1208 = vmatpush2.msra.mxu0 %v620
  %1209 = vmatprep.subr.mxu0 0.0
  %1210 = vmatpush2.msra.mxu0 %v619
  %1211 = vmatprep.subr.mxu0 0.0
  %1212 = vmatpush2.msra.mxu0 %v618
  %1213 = vmatprep.subr.mxu0 0.0
  %1214 = vmatpush2.msra.mxu0 %v617
  %1215 = vmatprep.subr.mxu0 0.0
  %1216 = vmatpush2.msra.mxu0 %v616
  %1217 = vmatprep.mubr.f32.mxu0 %v1148
  %1218 = vmatmul.mubr.f32.gmra.mxu0 %v1147
  %v1219 = vpop.f32.mrf.mxu0
  %v1220 = vadd.f32 %v640, %v1219
  %v1221 = vpop.f32.mrf.mxu0
  %1222 = vdwg.mxu0
  %1223 = vmatprep.subr.mxu0 0.0
  %1224 = vmatpush1.msra.mxu0 0.0
  %1225 = vmatprep.subr.mxu0 0.0
  %1226 = vmatpush1.msra.mxu0 0.0
  %1227 = vmatprep.subr.mxu0 0.0
  %1228 = vmatpush1.msra.mxu0 0.0
  %1229 = vmatprep.subr.mxu0 0.0
  %1230 = vmatpush1.msra.mxu0 0.0
  %1231 = vmatprep.subr.mxu0 0.0
  %1232 = vmatpush1.msra.mxu0 0.0
  %1233 = vmatprep.subr.mxu0 0.0
  %1234 = vmatpush1.msra.mxu0 0.0
  %1235 = vmatprep.subr.mxu0 0.0
  %1236 = vmatpush1.msra.mxu0 0.0
  %1237 = vmatprep.subr.mxu0 0.0
  %1238 = vmatpush1.msra.mxu0 0.0
  %1239 = vmatprep.subr.mxu0 0.0
  %1240 = vmatpush1.msra.mxu0 %v639
  %1241 = vmatprep.subr.mxu0 0.0
  %1242 = vmatpush1.msra.mxu0 %v638
  %1243 = vmatprep.subr.mxu0 0.0
  %1244 = vmatpush1.msra.mxu0 %v637
  %1245 = vmatprep.subr.mxu0 0.0
  %1246 = vmatpush1.msra.mxu0 %v636
  %1247 = vmatprep.subr.mxu0 0.0
  %1248 = vmatpush1.msra.mxu0 %v635
  %1249 = vmatprep.subr.mxu0 0.0
  %1250 = vmatpush1.msra.mxu0 %v634
  %1251 = vmatprep.subr.mxu0 0.0
  %1252 = vmatpush1.msra.mxu0 %v633
  %1253 = vmatprep.subr.mxu0 0.0
  %1254 = vmatpush1.msra.mxu0 %v632
  %1255 = vmatprep.subr.mxu0 0.0
  %1256 = vmatpush2.msra.mxu0 0.0
  %1257 = vmatprep.subr.mxu0 0.0
  %1258 = vmatpush2.msra.mxu0 0.0
  %1259 = vmatprep.subr.mxu0 0.0
  %1260 = vmatpush2.msra.mxu0 0.0
  %1261 = vmatprep.subr.mxu0 0.0
  %1262 = vmatpush2.msra.mxu0 0.0
  %1263 = vmatprep.subr.mxu0 0.0
  %1264 = vmatpush2.msra.mxu0 0.0
  %1265 = vmatprep.subr.mxu0 0.0
  %1266 = vmatpush2.msra.mxu0 0.0
  %1267 = vmatprep.subr.mxu0 0.0
  %1268 = vmatpush2.msra.mxu0 0.0
  %1269 = vmatprep.subr.mxu0 0.0
  %1270 = vmatpush2.msra.mxu0 0.0
  %1271 = vmatprep.subr.mxu0 0.0
  %1272 = vmatpush2.msra.mxu0 0.0
  %1273 = vmatprep.subr.mxu0 0.0
  %1274 = vmatpush2.msra.mxu0 0.0
  %1275 = vmatprep.subr.mxu0 0.0
  %1276 = vmatpush2.msra.mxu0 0.0
  %1277 = vmatprep.subr.mxu0 0.0
  %1278 = vmatpush2.msra.mxu0 0.0
  %1279 = vmatprep.subr.mxu0 0.0
  %1280 = vmatpush2.msra.mxu0 0.0
  %1281 = vmatprep.subr.mxu0 0.0
  %1282 = vmatpush2.msra.mxu0 0.0
  %1283 = vmatprep.subr.mxu0 0.0
  %1284 = vmatpush2.msra.mxu0 0.0
  %1285 = vmatprep.subr.mxu0 0.0
  %1286 = vmatpush2.msra.mxu0 0.0
  %1287 = vmatprep.mubr.f32.mxu0 0.0
  %1288 = vmatmul.mubr.f32.gmra.mxu0 %v1151
  %v1289 = vpop.f32.mrf.mxu0
  %v1290 = vadd.f32 %v1220, %v1289
  %v1291 = vpop.f32.mrf.mxu0
  %1292 = vdwg.mxu0
  %1293 = vst [vmem:[%s8 + $0x3] sm:$0x1] %v1290
  %v1294 = vld [vmem:[#allocation2 + $0xa] sm:$0x7]
  %v1296 = vlaneseq
  %v1297 = vshrl.u32 %v1296, 7
  %v1298 = vsub.s32 0, %v1297
  %v1299 = vrot.slane %v1294, %v1298
  %v1300 = vlaneseq
  %v1301 = vshrl.u32 %v1300, 7
  %v1302 = vsub.s32 1, %v1301
  %v1303 = vrot.slane %v1294, %v1302
  %v1304 = vlaneseq
  %v1305 = vshrl.u32 %v1304, 7
  %v1306 = vsub.s32 2, %v1305
  %v1307 = vrot.slane %v1294, %v1306
  %v1310 = vsel %vm657, %v1307, 0
  %1312 = vmatprep.subr.mxu0 0.0
  %1313 = vmatpush1.msra.mxu0 %v615
  %1314 = vmatprep.subr.mxu0 0.0
  %1315 = vmatpush1.msra.mxu0 %v614
  %1316 = vmatprep.subr.mxu0 0.0
  %1317 = vmatpush1.msra.mxu0 %v613
  %1318 = vmatprep.subr.mxu0 0.0
  %1319 = vmatpush1.msra.mxu0 %v612
  %1320 = vmatprep.subr.mxu0 0.0
  %1321 = vmatpush1.msra.mxu0 %v611
  %1322 = vmatprep.subr.mxu0 0.0
  %1323 = vmatpush1.msra.mxu0 %v610
  %1324 = vmatprep.subr.mxu0 0.0
  %1325 = vmatpush1.msra.mxu0 %v609
  %1326 = vmatprep.subr.mxu0 0.0
  %1327 = vmatpush1.msra.mxu0 %v608
  %1328 = vmatprep.subr.mxu0 0.0
  %1329 = vmatpush1.msra.mxu0 %v607
  %1330 = vmatprep.subr.mxu0 0.0
  %1331 = vmatpush1.msra.mxu0 %v606
  %1332 = vmatprep.subr.mxu0 0.0
  %1333 = vmatpush1.msra.mxu0 %v605
  %1334 = vmatprep.subr.mxu0 0.0
  %1335 = vmatpush1.msra.mxu0 %v604
  %1336 = vmatprep.subr.mxu0 0.0
  %1337 = vmatpush1.msra.mxu0 %v603
  %1338 = vmatprep.subr.mxu0 0.0
  %1339 = vmatpush1.msra.mxu0 %v602
  %1340 = vmatprep.subr.mxu0 0.0
  %1341 = vmatpush1.msra.mxu0 %v601
  %1342 = vmatprep.subr.mxu0 0.0
  %1343 = vmatpush1.msra.mxu0 %v600
  %1344 = vmatprep.subr.mxu0 0.0
  %1345 = vmatpush2.msra.mxu0 %v631
  %1346 = vmatprep.subr.mxu0 0.0
  %1347 = vmatpush2.msra.mxu0 %v630
  %1348 = vmatprep.subr.mxu0 0.0
  %1349 = vmatpush2.msra.mxu0 %v629
  %1350 = vmatprep.subr.mxu0 0.0
  %1351 = vmatpush2.msra.mxu0 %v628
  %1352 = vmatprep.subr.mxu0 0.0
  %1353 = vmatpush2.msra.mxu0 %v627
  %1354 = vmatprep.subr.mxu0 0.0
  %1355 = vmatpush2.msra.mxu0 %v626
  %1356 = vmatprep.subr.mxu0 0.0
  %1357 = vmatpush2.msra.mxu0 %v625
  %1358 = vmatprep.subr.mxu0 0.0
  %1359 = vmatpush2.msra.mxu0 %v624
  %1360 = vmatprep.subr.mxu0 0.0
  %1361 = vmatpush2.msra.mxu0 %v623
  %1362 = vmatprep.subr.mxu0 0.0
  %1363 = vmatpush2.msra.mxu0 %v622
  %1364 = vmatprep.subr.mxu0 0.0
  %1365 = vmatpush2.msra.mxu0 %v621
  %1366 = vmatprep.subr.mxu0 0.0
  %1367 = vmatpush2.msra.mxu0 %v620
  %1368 = vmatprep.subr.mxu0 0.0
  %1369 = vmatpush2.msra.mxu0 %v619
  %1370 = vmatprep.subr.mxu0 0.0
  %1371 = vmatpush2.msra.mxu0 %v618
  %1372 = vmatprep.subr.mxu0 0.0
  %1373 = vmatpush2.msra.mxu0 %v617
  %1374 = vmatprep.subr.mxu0 0.0
  %1375 = vmatpush2.msra.mxu0 %v616
  %1376 = vmatprep.mubr.f32.mxu0 %v1303
  %1377 = vmatmul.mubr.f32.gmra.mxu0 %v1299
  %v1378 = vpop.f32.mrf.mxu0
  %v1379 = vadd.f32 %v640, %v1378
  %v1380 = vpop.f32.mrf.mxu0
  %1381 = vdwg.mxu0
  %1382 = vmatprep.subr.mxu0 0.0
  %1383 = vmatpush1.msra.mxu0 0.0
  %1384 = vmatprep.subr.mxu0 0.0
  %1385 = vmatpush1.msra.mxu0 0.0
  %1386 = vmatprep.subr.mxu0 0.0
  %1387 = vmatpush1.msra.mxu0 0.0
  %1388 = vmatprep.subr.mxu0 0.0
  %1389 = vmatpush1.msra.mxu0 0.0
  %1390 = vmatprep.subr.mxu0 0.0
  %1391 = vmatpush1.msra.mxu0 0.0
  %1392 = vmatprep.subr.mxu0 0.0
  %1393 = vmatpush1.msra.mxu0 0.0
  %1394 = vmatprep.subr.mxu0 0.0
  %1395 = vmatpush1.msra.mxu0 0.0
  %1396 = vmatprep.subr.mxu0 0.0
  %1397 = vmatpush1.msra.mxu0 0.0
  %1398 = vmatprep.subr.mxu0 0.0
  %1399 = vmatpush1.msra.mxu0 %v639
  %1400 = vmatprep.subr.mxu0 0.0
  %1401 = vmatpush1.msra.mxu0 %v638
  %1402 = vmatprep.subr.mxu0 0.0
  %1403 = vmatpush1.msra.mxu0 %v637
  %1404 = vmatprep.subr.mxu0 0.0
  %1405 = vmatpush1.msra.mxu0 %v636
  %1406 = vmatprep.subr.mxu0 0.0
  %1407 = vmatpush1.msra.mxu0 %v635
  %1408 = vmatprep.subr.mxu0 0.0
  %1409 = vmatpush1.msra.mxu0 %v634
  %1410 = vmatprep.subr.mxu0 0.0
  %1411 = vmatpush1.msra.mxu0 %v633
  %1412 = vmatprep.subr.mxu0 0.0
  %1413 = vmatpush1.msra.mxu0 %v632
  %1414 = vmatprep.subr.mxu0 0.0
  %1415 = vmatpush2.msra.mxu0 0.0
  %1416 = vmatprep.subr.mxu0 0.0
  %1417 = vmatpush2.msra.mxu0 0.0
  %1418 = vmatprep.subr.mxu0 0.0
  %1419 = vmatpush2.msra.mxu0 0.0
  %1420 = vmatprep.subr.mxu0 0.0
  %1421 = vmatpush2.msra.mxu0 0.0
  %1422 = vmatprep.subr.mxu0 0.0
  %1423 = vmatpush2.msra.mxu0 0.0
  %1424 = vmatprep.subr.mxu0 0.0
  %1425 = vmatpush2.msra.mxu0 0.0
  %1426 = vmatprep.subr.mxu0 0.0
  %1427 = vmatpush2.msra.mxu0 0.0
  %1428 = vmatprep.subr.mxu0 0.0
  %1429 = vmatpush2.msra.mxu0 0.0
  %1430 = vmatprep.subr.mxu0 0.0
  %1431 = vmatpush2.msra.mxu0 0.0
  %1432 = vmatprep.subr.mxu0 0.0
  %1433 = vmatpush2.msra.mxu0 0.0
  %1434 = vmatprep.subr.mxu0 0.0
  %1435 = vmatpush2.msra.mxu0 0.0
  %1436 = vmatprep.subr.mxu0 0.0
  %1437 = vmatpush2.msra.mxu0 0.0
  %1438 = vmatprep.subr.mxu0 0.0
  %1439 = vmatpush2.msra.mxu0 0.0
  %1440 = vmatprep.subr.mxu0 0.0
  %1441 = vmatpush2.msra.mxu0 0.0
  %1442 = vmatprep.subr.mxu0 0.0
  %1443 = vmatpush2.msra.mxu0 0.0
  %1444 = vmatprep.subr.mxu0 0.0
  %1445 = vmatpush2.msra.mxu0 0.0
  %1446 = vmatprep.mubr.f32.mxu0 0.0
  %1447 = vmatmul.mubr.f32.gmra.mxu0 %v1310
  %v1448 = vpop.f32.mrf.mxu0
  %v1449 = vadd.f32 %v1379, %v1448
  %v1450 = vpop.f32.mrf.mxu0
  %1451 = vdwg.mxu0
  %1452 = vst [vmem:[%s8 + $0x4] sm:$0x1] %v1449
  %v1453 = vld [vmem:[#allocation2 + $0xc] sm:$0x7]
  %v1455 = vlaneseq
  %v1456 = vshrl.u32 %v1455, 7
  %v1457 = vsub.s32 0, %v1456
  %v1458 = vrot.slane %v1453, %v1457
  %v1459 = vlaneseq
  %v1460 = vshrl.u32 %v1459, 7
  %v1461 = vsub.s32 1, %v1460
  %v1462 = vrot.slane %v1453, %v1461
  %v1463 = vlaneseq
  %v1464 = vshrl.u32 %v1463, 7
  %v1465 = vsub.s32 2, %v1464
  %v1466 = vrot.slane %v1453, %v1465
  %1467 = vrot.lane.b32.xlu0 %v1458, 64
  %v1468 = vpop.permute.xlu0 %1467
  %1469 = vrot.lane.b32.xlu0 %v1462, 64
  %v1470 = vpop.permute.xlu0 %1469
  %1471 = vrot.lane.b32.xlu0 %v1466, 64
  %v1472 = vpop.permute.xlu0 %1471
  %v1473 = vsel %vm657, %v1468, %v1470
  %v1474 = vsel %vm657, %v1470, %v1472
  %v1477 = vsel %vm657, %v1472, 0
  %1479 = vmatprep.subr.mxu0 0.0
  %1480 = vmatpush1.msra.mxu0 %v615
  %1481 = vmatprep.subr.mxu0 0.0
  %1482 = vmatpush1.msra.mxu0 %v614
  %1483 = vmatprep.subr.mxu0 0.0
  %1484 = vmatpush1.msra.mxu0 %v613
  %1485 = vmatprep.subr.mxu0 0.0
  %1486 = vmatpush1.msra.mxu0 %v612
  %1487 = vmatprep.subr.mxu0 0.0
  %1488 = vmatpush1.msra.mxu0 %v611
  %1489 = vmatprep.subr.mxu0 0.0
  %1490 = vmatpush1.msra.mxu0 %v610
  %1491 = vmatprep.subr.mxu0 0.0
  %1492 = vmatpush1.msra.mxu0 %v609
  %1493 = vmatprep.subr.mxu0 0.0
  %1494 = vmatpush1.msra.mxu0 %v608
  %1495 = vmatprep.subr.mxu0 0.0
  %1496 = vmatpush1.msra.mxu0 %v607
  %1497 = vmatprep.subr.mxu0 0.0
  %1498 = vmatpush1.msra.mxu0 %v606
  %1499 = vmatprep.subr.mxu0 0.0
  %1500 = vmatpush1.msra.mxu0 %v605
  %1501 = vmatprep.subr.mxu0 0.0
  %1502 = vmatpush1.msra.mxu0 %v604
  %1503 = vmatprep.subr.mxu0 0.0
  %1504 = vmatpush1.msra.mxu0 %v603
  %1505 = vmatprep.subr.mxu0 0.0
  %1506 = vmatpush1.msra.mxu0 %v602
  %1507 = vmatprep.subr.mxu0 0.0
  %1508 = vmatpush1.msra.mxu0 %v601
  %1509 = vmatprep.subr.mxu0 0.0
  %1510 = vmatpush1.msra.mxu0 %v600
  %1511 = vmatprep.subr.mxu0 0.0
  %1512 = vmatpush2.msra.mxu0 %v631
  %1513 = vmatprep.subr.mxu0 0.0
  %1514 = vmatpush2.msra.mxu0 %v630
  %1515 = vmatprep.subr.mxu0 0.0
  %1516 = vmatpush2.msra.mxu0 %v629
  %1517 = vmatprep.subr.mxu0 0.0
  %1518 = vmatpush2.msra.mxu0 %v628
  %1519 = vmatprep.subr.mxu0 0.0
  %1520 = vmatpush2.msra.mxu0 %v627
  %1521 = vmatprep.subr.mxu0 0.0
  %1522 = vmatpush2.msra.mxu0 %v626
  %1523 = vmatprep.subr.mxu0 0.0
  %1524 = vmatpush2.msra.mxu0 %v625
  %1525 = vmatprep.subr.mxu0 0.0
  %1526 = vmatpush2.msra.mxu0 %v624
  %1527 = vmatprep.subr.mxu0 0.0
  %1528 = vmatpush2.msra.mxu0 %v623
  %1529 = vmatprep.subr.mxu0 0.0
  %1530 = vmatpush2.msra.mxu0 %v622
  %1531 = vmatprep.subr.mxu0 0.0
  %1532 = vmatpush2.msra.mxu0 %v621
  %1533 = vmatprep.subr.mxu0 0.0
  %1534 = vmatpush2.msra.mxu0 %v620
  %1535 = vmatprep.subr.mxu0 0.0
  %1536 = vmatpush2.msra.mxu0 %v619
  %1537 = vmatprep.subr.mxu0 0.0
  %1538 = vmatpush2.msra.mxu0 %v618
  %1539 = vmatprep.subr.mxu0 0.0
  %1540 = vmatpush2.msra.mxu0 %v617
  %1541 = vmatprep.subr.mxu0 0.0
  %1542 = vmatpush2.msra.mxu0 %v616
  %1543 = vmatprep.mubr.f32.mxu0 %v1474
  %1544 = vmatmul.mubr.f32.gmra.mxu0 %v1473
  %v1545 = vpop.f32.mrf.mxu0
  %v1546 = vadd.f32 %v640, %v1545
  %v1547 = vpop.f32.mrf.mxu0
  %1548 = vdwg.mxu0
  %1549 = vmatprep.subr.mxu0 0.0
  %1550 = vmatpush1.msra.mxu0 0.0
  %1551 = vmatprep.subr.mxu0 0.0
  %1552 = vmatpush1.msra.mxu0 0.0
  %1553 = vmatprep.subr.mxu0 0.0
  %1554 = vmatpush1.msra.mxu0 0.0
  %1555 = vmatprep.subr.mxu0 0.0
  %1556 = vmatpush1.msra.mxu0 0.0
  %1557 = vmatprep.subr.mxu0 0.0
  %1558 = vmatpush1.msra.mxu0 0.0
  %1559 = vmatprep.subr.mxu0 0.0
  %1560 = vmatpush1.msra.mxu0 0.0
  %1561 = vmatprep.subr.mxu0 0.0
  %1562 = vmatpush1.msra.mxu0 0.0
  %1563 = vmatprep.subr.mxu0 0.0
  %1564 = vmatpush1.msra.mxu0 0.0
  %1565 = vmatprep.subr.mxu0 0.0
  %1566 = vmatpush1.msra.mxu0 %v639
  %1567 = vmatprep.subr.mxu0 0.0
  %1568 = vmatpush1.msra.mxu0 %v638
  %1569 = vmatprep.subr.mxu0 0.0
  %1570 = vmatpush1.msra.mxu0 %v637
  %1571 = vmatprep.subr.mxu0 0.0
  %1572 = vmatpush1.msra.mxu0 %v636
  %1573 = vmatprep.subr.mxu0 0.0
  %1574 = vmatpush1.msra.mxu0 %v635
  %1575 = vmatprep.subr.mxu0 0.0
  %1576 = vmatpush1.msra.mxu0 %v634
  %1577 = vmatprep.subr.mxu0 0.0
  %1578 = vmatpush1.msra.mxu0 %v633
  %1579 = vmatprep.subr.mxu0 0.0
  %1580 = vmatpush1.msra.mxu0 %v632
  %1581 = vmatprep.subr.mxu0 0.0
  %1582 = vmatpush2.msra.mxu0 0.0
  %1583 = vmatprep.subr.mxu0 0.0
  %1584 = vmatpush2.msra.mxu0 0.0
  %1585 = vmatprep.subr.mxu0 0.0
  %1586 = vmatpush2.msra.mxu0 0.0
  %1587 = vmatprep.subr.mxu0 0.0
  %1588 = vmatpush2.msra.mxu0 0.0
  %1589 = vmatprep.subr.mxu0 0.0
  %1590 = vmatpush2.msra.mxu0 0.0
  %1591 = vmatprep.subr.mxu0 0.0
  %1592 = vmatpush2.msra.mxu0 0.0
  %1593 = vmatprep.subr.mxu0 0.0
  %1594 = vmatpush2.msra.mxu0 0.0
  %1595 = vmatprep.subr.mxu0 0.0
  %1596 = vmatpush2.msra.mxu0 0.0
  %1597 = vmatprep.subr.mxu0 0.0
  %1598 = vmatpush2.msra.mxu0 0.0
  %1599 = vmatprep.subr.mxu0 0.0
  %1600 = vmatpush2.msra.mxu0 0.0
  %1601 = vmatprep.subr.mxu0 0.0
  %1602 = vmatpush2.msra.mxu0 0.0
  %1603 = vmatprep.subr.mxu0 0.0
  %1604 = vmatpush2.msra.mxu0 0.0
  %1605 = vmatprep.subr.mxu0 0.0
  %1606 = vmatpush2.msra.mxu0 0.0
  %1607 = vmatprep.subr.mxu0 0.0
  %1608 = vmatpush2.msra.mxu0 0.0
  %1609 = vmatprep.subr.mxu0 0.0
  %1610 = vmatpush2.msra.mxu0 0.0
  %1611 = vmatprep.subr.mxu0 0.0
  %1612 = vmatpush2.msra.mxu0 0.0
  %1613 = vmatprep.mubr.f32.mxu0 0.0
  %1614 = vmatmul.mubr.f32.gmra.mxu0 %v1477
  %v1615 = vpop.f32.mrf.mxu0
  %v1616 = vadd.f32 %v1546, %v1615
  %v1617 = vpop.f32.mrf.mxu0
  %1618 = vdwg.mxu0
  %1619 = vst [vmem:[%s8 + $0x5] sm:$0x1] %v1616
  %v1620 = vld [vmem:[#allocation2 + $0xf] sm:$0x7]
  %v1622 = vlaneseq
  %v1623 = vshrl.u32 %v1622, 7
  %v1624 = vsub.s32 0, %v1623
  %v1625 = vrot.slane %v1620, %v1624
  %v1626 = vlaneseq
  %v1627 = vshrl.u32 %v1626, 7
  %v1628 = vsub.s32 1, %v1627
  %v1629 = vrot.slane %v1620, %v1628
  %v1630 = vlaneseq
  %v1631 = vshrl.u32 %v1630, 7
  %v1632 = vsub.s32 2, %v1631
  %v1633 = vrot.slane %v1620, %v1632
  %v1636 = vsel %vm657, %v1633, 0
  %1638 = vmatprep.subr.mxu0 0.0
  %1639 = vmatpush1.msra.mxu0 %v615
  %1640 = vmatprep.subr.mxu0 0.0
  %1641 = vmatpush1.msra.mxu0 %v614
  %1642 = vmatprep.subr.mxu0 0.0
  %1643 = vmatpush1.msra.mxu0 %v613
  %1644 = vmatprep.subr.mxu0 0.0
  %1645 = vmatpush1.msra.mxu0 %v612
  %1646 = vmatprep.subr.mxu0 0.0
  %1647 = vmatpush1.msra.mxu0 %v611
  %1648 = vmatprep.subr.mxu0 0.0
  %1649 = vmatpush1.msra.mxu0 %v610
  %1650 = vmatprep.subr.mxu0 0.0
  %1651 = vmatpush1.msra.mxu0 %v609
  %1652 = vmatprep.subr.mxu0 0.0
  %1653 = vmatpush1.msra.mxu0 %v608
  %1654 = vmatprep.subr.mxu0 0.0
  %1655 = vmatpush1.msra.mxu0 %v607
  %1656 = vmatprep.subr.mxu0 0.0
  %1657 = vmatpush1.msra.mxu0 %v606
  %1658 = vmatprep.subr.mxu0 0.0
  %1659 = vmatpush1.msra.mxu0 %v605
  %1660 = vmatprep.subr.mxu0 0.0
  %1661 = vmatpush1.msra.mxu0 %v604
  %1662 = vmatprep.subr.mxu0 0.0
  %1663 = vmatpush1.msra.mxu0 %v603
  %1664 = vmatprep.subr.mxu0 0.0
  %1665 = vmatpush1.msra.mxu0 %v602
  %1666 = vmatprep.subr.mxu0 0.0
  %1667 = vmatpush1.msra.mxu0 %v601
  %1668 = vmatprep.subr.mxu0 0.0
  %1669 = vmatpush1.msra.mxu0 %v600
  %1670 = vmatprep.subr.mxu0 0.0
  %1671 = vmatpush2.msra.mxu0 %v631
  %1672 = vmatprep.subr.mxu0 0.0
  %1673 = vmatpush2.msra.mxu0 %v630
  %1674 = vmatprep.subr.mxu0 0.0
  %1675 = vmatpush2.msra.mxu0 %v629
  %1676 = vmatprep.subr.mxu0 0.0
  %1677 = vmatpush2.msra.mxu0 %v628
  %1678 = vmatprep.subr.mxu0 0.0
  %1679 = vmatpush2.msra.mxu0 %v627
  %1680 = vmatprep.subr.mxu0 0.0
  %1681 = vmatpush2.msra.mxu0 %v626
  %1682 = vmatprep.subr.mxu0 0.0
  %1683 = vmatpush2.msra.mxu0 %v625
  %1684 = vmatprep.subr.mxu0 0.0
  %1685 = vmatpush2.msra.mxu0 %v624
  %1686 = vmatprep.subr.mxu0 0.0
  %1687 = vmatpush2.msra.mxu0 %v623
  %1688 = vmatprep.subr.mxu0 0.0
  %1689 = vmatpush2.msra.mxu0 %v622
  %1690 = vmatprep.subr.mxu0 0.0
  %1691 = vmatpush2.msra.mxu0 %v621
  %1692 = vmatprep.subr.mxu0 0.0
  %1693 = vmatpush2.msra.mxu0 %v620
  %1694 = vmatprep.subr.mxu0 0.0
  %1695 = vmatpush2.msra.mxu0 %v619
  %1696 = vmatprep.subr.mxu0 0.0
  %1697 = vmatpush2.msra.mxu0 %v618
  %1698 = vmatprep.subr.mxu0 0.0
  %1699 = vmatpush2.msra.mxu0 %v617
  %1700 = vmatprep.subr.mxu0 0.0
  %1701 = vmatpush2.msra.mxu0 %v616
  %1702 = vmatprep.mubr.f32.mxu0 %v1629
  %1703 = vmatmul.mubr.f32.gmra.mxu0 %v1625
  %v1704 = vpop.f32.mrf.mxu0
  %v1705 = vadd.f32 %v640, %v1704
  %v1706 = vpop.f32.mrf.mxu0
  %1707 = vdwg.mxu0
  %1708 = vmatprep.subr.mxu0 0.0
  %1709 = vmatpush1.msra.mxu0 0.0
  %1710 = vmatprep.subr.mxu0 0.0
  %1711 = vmatpush1.msra.mxu0 0.0
  %1712 = vmatprep.subr.mxu0 0.0
  %1713 = vmatpush1.msra.mxu0 0.0
  %1714 = vmatprep.subr.mxu0 0.0
  %1715 = vmatpush1.msra.mxu0 0.0
  %1716 = vmatprep.subr.mxu0 0.0
  %1717 = vmatpush1.msra.mxu0 0.0
  %1718 = vmatprep.subr.mxu0 0.0
  %1719 = vmatpush1.msra.mxu0 0.0
  %1720 = vmatprep.subr.mxu0 0.0
  %1721 = vmatpush1.msra.mxu0 0.0
  %1722 = vmatprep.subr.mxu0 0.0
  %1723 = vmatpush1.msra.mxu0 0.0
  %1724 = vmatprep.subr.mxu0 0.0
  %1725 = vmatpush1.msra.mxu0 %v639
  %1726 = vmatprep.subr.mxu0 0.0
  %1727 = vmatpush1.msra.mxu0 %v638
  %1728 = vmatprep.subr.mxu0 0.0
  %1729 = vmatpush1.msra.mxu0 %v637
  %1730 = vmatprep.subr.mxu0 0.0
  %1731 = vmatpush1.msra.mxu0 %v636
  %1732 = vmatprep.subr.mxu0 0.0
  %1733 = vmatpush1.msra.mxu0 %v635
  %1734 = vmatprep.subr.mxu0 0.0
  %1735 = vmatpush1.msra.mxu0 %v634
  %1736 = vmatprep.subr.mxu0 0.0
  %1737 = vmatpush1.msra.mxu0 %v633
  %1738 = vmatprep.subr.mxu0 0.0
  %1739 = vmatpush1.msra.mxu0 %v632
  %1740 = vmatprep.subr.mxu0 0.0
  %1741 = vmatpush2.msra.mxu0 0.0
  %1742 = vmatprep.subr.mxu0 0.0
  %1743 = vmatpush2.msra.mxu0 0.0
  %1744 = vmatprep.subr.mxu0 0.0
  %1745 = vmatpush2.msra.mxu0 0.0
  %1746 = vmatprep.subr.mxu0 0.0
  %1747 = vmatpush2.msra.mxu0 0.0
  %1748 = vmatprep.subr.mxu0 0.0
  %1749 = vmatpush2.msra.mxu0 0.0
  %1750 = vmatprep.subr.mxu0 0.0
  %1751 = vmatpush2.msra.mxu0 0.0
  %1752 = vmatprep.subr.mxu0 0.0
  %1753 = vmatpush2.msra.mxu0 0.0
  %1754 = vmatprep.subr.mxu0 0.0
  %1755 = vmatpush2.msra.mxu0 0.0
  %1756 = vmatprep.subr.mxu0 0.0
  %1757 = vmatpush2.msra.mxu0 0.0
  %1758 = vmatprep.subr.mxu0 0.0
  %1759 = vmatpush2.msra.mxu0 0.0
  %1760 = vmatprep.subr.mxu0 0.0
  %1761 = vmatpush2.msra.mxu0 0.0
  %1762 = vmatprep.subr.mxu0 0.0
  %1763 = vmatpush2.msra.mxu0 0.0
  %1764 = vmatprep.subr.mxu0 0.0
  %1765 = vmatpush2.msra.mxu0 0.0
  %1766 = vmatprep.subr.mxu0 0.0
  %1767 = vmatpush2.msra.mxu0 0.0
  %1768 = vmatprep.subr.mxu0 0.0
  %1769 = vmatpush2.msra.mxu0 0.0
  %1770 = vmatprep.subr.mxu0 0.0
  %1771 = vmatpush2.msra.mxu0 0.0
  %1772 = vmatprep.mubr.f32.mxu0 0.0
  %1773 = vmatmul.mubr.f32.gmra.mxu0 %v1636
  %v1774 = vpop.f32.mrf.mxu0
  %v1775 = vadd.f32 %v1705, %v1774
  %v1776 = vpop.f32.mrf.mxu0
  %1777 = vdwg.mxu0
  %1778 = vst [vmem:[%s8 + $0x6] sm:$0x1] %v1775
  %v1779 = vld [vmem:[#allocation2 + $0x11] sm:$0x7]
  %v1781 = vlaneseq
  %v1782 = vshrl.u32 %v1781, 7
  %v1783 = vsub.s32 0, %v1782
  %v1784 = vrot.slane %v1779, %v1783
  %v1785 = vlaneseq
  %v1786 = vshrl.u32 %v1785, 7
  %v1787 = vsub.s32 1, %v1786
  %v1788 = vrot.slane %v1779, %v1787
  %v1789 = vlaneseq
  %v1790 = vshrl.u32 %v1789, 7
  %v1791 = vsub.s32 2, %v1790
  %v1792 = vrot.slane %v1779, %v1791
  %1793 = vrot.lane.b32.xlu0 %v1784, 64
  %v1794 = vpop.permute.xlu0 %1793
  %1795 = vrot.lane.b32.xlu0 %v1788, 64
  %v1796 = vpop.permute.xlu0 %1795
  %1797 = vrot.lane.b32.xlu0 %v1792, 64
  %v1798 = vpop.permute.xlu0 %1797
  %v1799 = vsel %vm657, %v1794, %v1796
  %v1800 = vsel %vm657, %v1796, %v1798
  %v1803 = vsel %vm657, %v1798, 0
  %1805 = vmatprep.subr.mxu0 0.0
  %1806 = vmatpush1.msra.mxu0 %v615
  %1807 = vmatprep.subr.mxu0 0.0
  %1808 = vmatpush1.msra.mxu0 %v614
  %1809 = vmatprep.subr.mxu0 0.0
  %1810 = vmatpush1.msra.mxu0 %v613
  %1811 = vmatprep.subr.mxu0 0.0
  %1812 = vmatpush1.msra.mxu0 %v612
  %1813 = vmatprep.subr.mxu0 0.0
  %1814 = vmatpush1.msra.mxu0 %v611
  %1815 = vmatprep.subr.mxu0 0.0
  %1816 = vmatpush1.msra.mxu0 %v610
  %1817 = vmatprep.subr.mxu0 0.0
  %1818 = vmatpush1.msra.mxu0 %v609
  %1819 = vmatprep.subr.mxu0 0.0
  %1820 = vmatpush1.msra.mxu0 %v608
  %1821 = vmatprep.subr.mxu0 0.0
  %1822 = vmatpush1.msra.mxu0 %v607
  %1823 = vmatprep.subr.mxu0 0.0
  %1824 = vmatpush1.msra.mxu0 %v606
  %1825 = vmatprep.subr.mxu0 0.0
  %1826 = vmatpush1.msra.mxu0 %v605
  %1827 = vmatprep.subr.mxu0 0.0
  %1828 = vmatpush1.msra.mxu0 %v604
  %1829 = vmatprep.subr.mxu0 0.0
  %1830 = vmatpush1.msra.mxu0 %v603
  %1831 = vmatprep.subr.mxu0 0.0
  %1832 = vmatpush1.msra.mxu0 %v602
  %1833 = vmatprep.subr.mxu0 0.0
  %1834 = vmatpush1.msra.mxu0 %v601
  %1835 = vmatprep.subr.mxu0 0.0
  %1836 = vmatpush1.msra.mxu0 %v600
  %1837 = vmatprep.subr.mxu0 0.0
  %1838 = vmatpush2.msra.mxu0 %v631
  %1839 = vmatprep.subr.mxu0 0.0
  %1840 = vmatpush2.msra.mxu0 %v630
  %1841 = vmatprep.subr.mxu0 0.0
  %1842 = vmatpush2.msra.mxu0 %v629
  %1843 = vmatprep.subr.mxu0 0.0
  %1844 = vmatpush2.msra.mxu0 %v628
  %1845 = vmatprep.subr.mxu0 0.0
  %1846 = vmatpush2.msra.mxu0 %v627
  %1847 = vmatprep.subr.mxu0 0.0
  %1848 = vmatpush2.msra.mxu0 %v626
  %1849 = vmatprep.subr.mxu0 0.0
  %1850 = vmatpush2.msra.mxu0 %v625
  %1851 = vmatprep.subr.mxu0 0.0
  %1852 = vmatpush2.msra.mxu0 %v624
  %1853 = vmatprep.subr.mxu0 0.0
  %1854 = vmatpush2.msra.mxu0 %v623
  %1855 = vmatprep.subr.mxu0 0.0
  %1856 = vmatpush2.msra.mxu0 %v622
  %1857 = vmatprep.subr.mxu0 0.0
  %1858 = vmatpush2.msra.mxu0 %v621
  %1859 = vmatprep.subr.mxu0 0.0
  %1860 = vmatpush2.msra.mxu0 %v620
  %1861 = vmatprep.subr.mxu0 0.0
  %1862 = vmatpush2.msra.mxu0 %v619
  %1863 = vmatprep.subr.mxu0 0.0
  %1864 = vmatpush2.msra.mxu0 %v618
  %1865 = vmatprep.subr.mxu0 0.0
  %1866 = vmatpush2.msra.mxu0 %v617
  %1867 = vmatprep.subr.mxu0 0.0
  %1868 = vmatpush2.msra.mxu0 %v616
  %1869 = vmatprep.mubr.f32.mxu0 %v1800
  %1870 = vmatmul.mubr.f32.gmra.mxu0 %v1799
  %v1871 = vpop.f32.mrf.mxu0
  %v1872 = vadd.f32 %v640, %v1871
  %v1873 = vpop.f32.mrf.mxu0
  %1874 = vdwg.mxu0
  %1875 = vmatprep.subr.mxu0 0.0
  %1876 = vmatpush1.msra.mxu0 0.0
  %1877 = vmatprep.subr.mxu0 0.0
  %1878 = vmatpush1.msra.mxu0 0.0
  %1879 = vmatprep.subr.mxu0 0.0
  %1880 = vmatpush1.msra.mxu0 0.0
  %1881 = vmatprep.subr.mxu0 0.0
  %1882 = vmatpush1.msra.mxu0 0.0
  %1883 = vmatprep.subr.mxu0 0.0
  %1884 = vmatpush1.msra.mxu0 0.0
  %1885 = vmatprep.subr.mxu0 0.0
  %1886 = vmatpush1.msra.mxu0 0.0
  %1887 = vmatprep.subr.mxu0 0.0
  %1888 = vmatpush1.msra.mxu0 0.0
  %1889 = vmatprep.subr.mxu0 0.0
  %1890 = vmatpush1.msra.mxu0 0.0
  %1891 = vmatprep.subr.mxu0 0.0
  %1892 = vmatpush1.msra.mxu0 %v639
  %1893 = vmatprep.subr.mxu0 0.0
  %1894 = vmatpush1.msra.mxu0 %v638
  %1895 = vmatprep.subr.mxu0 0.0
  %1896 = vmatpush1.msra.mxu0 %v637
  %1897 = vmatprep.subr.mxu0 0.0
  %1898 = vmatpush1.msra.mxu0 %v636
  %1899 = vmatprep.subr.mxu0 0.0
  %1900 = vmatpush1.msra.mxu0 %v635
  %1901 = vmatprep.subr.mxu0 0.0
  %1902 = vmatpush1.msra.mxu0 %v634
  %1903 = vmatprep.subr.mxu0 0.0
  %1904 = vmatpush1.msra.mxu0 %v633
  %1905 = vmatprep.subr.mxu0 0.0
  %1906 = vmatpush1.msra.mxu0 %v632
  %1907 = vmatprep.subr.mxu0 0.0
  %1908 = vmatpush2.msra.mxu0 0.0
  %1909 = vmatprep.subr.mxu0 0.0
  %1910 = vmatpush2.msra.mxu0 0.0
  %1911 = vmatprep.subr.mxu0 0.0
  %1912 = vmatpush2.msra.mxu0 0.0
  %1913 = vmatprep.subr.mxu0 0.0
  %1914 = vmatpush2.msra.mxu0 0.0
  %1915 = vmatprep.subr.mxu0 0.0
  %1916 = vmatpush2.msra.mxu0 0.0
  %1917 = vmatprep.subr.mxu0 0.0
  %1918 = vmatpush2.msra.mxu0 0.0
  %1919 = vmatprep.subr.mxu0 0.0
  %1920 = vmatpush2.msra.mxu0 0.0
  %1921 = vmatprep.subr.mxu0 0.0
  %1922 = vmatpush2.msra.mxu0 0.0
  %1923 = vmatprep.subr.mxu0 0.0
  %1924 = vmatpush2.msra.mxu0 0.0
  %1925 = vmatprep.subr.mxu0 0.0
  %1926 = vmatpush2.msra.mxu0 0.0
  %1927 = vmatprep.subr.mxu0 0.0
  %1928 = vmatpush2.msra.mxu0 0.0
  %1929 = vmatprep.subr.mxu0 0.0
  %1930 = vmatpush2.msra.mxu0 0.0
  %1931 = vmatprep.subr.mxu0 0.0
  %1932 = vmatpush2.msra.mxu0 0.0
  %1933 = vmatprep.subr.mxu0 0.0
  %1934 = vmatpush2.msra.mxu0 0.0
  %1935 = vmatprep.subr.mxu0 0.0
  %1936 = vmatpush2.msra.mxu0 0.0
  %1937 = vmatprep.subr.mxu0 0.0
  %1938 = vmatpush2.msra.mxu0 0.0
  %1939 = vmatprep.mubr.f32.mxu0 0.0
  %1940 = vmatmul.mubr.f32.gmra.mxu0 %v1803
  %v1941 = vpop.f32.mrf.mxu0
  %v1942 = vadd.f32 %v1872, %v1941
  %v1943 = vpop.f32.mrf.mxu0
  %1944 = vdwg.mxu0
  %1945 = vst [vmem:[%s8 + $0x7] sm:$0x1] %v1942
  // Predicated region
  $region34: #{ann_classifier_forward.1} parent=0 // pred_check
    _
  $region35: #{ann_classifier_forward.1} parent=0 // pred_check_branch
    %1947 = sbr.rel (0) target = $region37
  $region36: #{ann_classifier_forward.1} parent=0 // pred_region
    _
  $region37: #{ann_classifier_forward.1} parent=0 // pred_fallthru
    _
  // Predicated region
  $region38: #{ann_classifier_forward.1} parent=0 // pred_check
    _
  $region39: #{ann_classifier_forward.1} parent=0 // pred_check_branch
    %1949 = sbr.rel (0) target = $region41
  $region40: #{ann_classifier_forward.1} parent=0 // pred_region
    _
  $region41: #{ann_classifier_forward.1} parent=0 // pred_fallthru
    _

</llo_original>
